<compile_context>
chip_gen: v5e
topology: v5e:2x2
jax: 0.10.0
libtpu: 0.0.40
codegen_flags: <defaults>
</compile_context>

<pallas_src>
import functools

import jax
import jax.numpy as jnp
from jax import lax
from jax.experimental import pallas as pl
from jax.experimental.pallas import tpu as pltpu

INPUT_DIM = 4
HIDDEN_DIM = 64
OUTPUT_DIM = 6

HIDDEN_PAD = 128   # H padded to a full vreg lane width
OUT_PAD = 128      # FC output padded to a lane-dense store width
BATCH_TILE = 8     # sequences per grid step (sublane-aligned)


def lstm_fc_kernel(x_ref, wih_ref, whh_ref, b_ref, wfc_ref, bfc_ref, out_ref):
    """Fused 1-layer LSTM (h0=c0=0) + Linear on last step, one batch tile.

    x_ref:   (T*BB, D)  bf16 time-major rows (row = t*BB + i) for this tile
    wih_ref: (D, 4*Hp)  bf16 input->gate weights, g-gate columns pre-scaled x2
    whh_ref: (Hp, 4*Hp) bf16 hidden->gate weights, padded rows zero, g cols x2
    b_ref:   (1, 4*Hp)  f32  b_ih + b_hh, padded columns zero, g cols x2
    wfc_ref: (Hp, Op)   bf16 fc weight, padded rows/columns zero
    bfc_ref: (1, Op)    f32  fc bias, padded columns zero
    out_ref: (BB, Op)   f32
    """
    BB, _ = out_ref.shape
    TB, _ = x_ref.shape
    T = TB // BB
    Hp = whh_ref.shape[0]

    whh = whh_ref[...]  # (Hp, 4Hp) bf16, loaded once, reused every step.
    # NOTE: on v7x, weight-stationary MXU driving (pltpu.matmul_push_rhs /
    # matmul_acc_lhs / matmul_pop) for whh would shave per-step RHS staging
    # latency; kept as portable jnp.dot so the same kernel runs on v5e/v6e.

    # Hoisted input projection + combined bias for ALL timesteps of this tile
    # (off the serial h->h critical path). f32 accumulation.
    xg = (
        jnp.dot(x_ref[...], wih_ref[...], preferred_element_type=jnp.float32)
        + b_ref[...]
    )  # (T*BB, 4Hp) f32; PyTorch gate order i, f, g, o along the last axis.

    h = jnp.zeros((BB, Hp), whh.dtype)      # bf16: only ever an MXU operand
    c = jnp.zeros((BB, Hp), jnp.float32)    # cell state stays f32 (v5e-safe)

    # Fully unrolled recurrence (T is a small static constant). Every xg row
    # slice is an aligned 8-sublane group and every gate slice is a whole
    # 128-lane vreg column group.
    for t in range(T):
        gates = xg[t * BB:(t + 1) * BB, :] + jnp.dot(
            h, whh, preferred_element_type=jnp.float32)
        s = jax.nn.sigmoid(gates)             # one full-width 4*Hp-lane sigmoid
        i_g = s[:, 0 * Hp:1 * Hp]
        f_g = s[:, 1 * Hp:2 * Hp]
        g_g = 2.0 * s[:, 2 * Hp:3 * Hp] - 1.0  # tanh(g) == 2*sigmoid(2g) - 1
        o_g = s[:, 3 * Hp:4 * Hp]
        c = f_g * c + i_g * g_g
        h = (o_g * jnp.tanh(c)).astype(whh.dtype)

    # Lane-dense bf16 FC head: (BB, Hp) x (Hp, Op) -> (BB, Op) f32; unmasked
    # full-width store. Wrapper slices [:B, :OUTPUT_DIM].
    out_ref[...] = (
        jnp.dot(h, wfc_ref[...], preferred_element_type=jnp.float32)
        + bfc_ref[...]
    )


def make_params(key, input_dim=INPUT_DIM, hidden_dim=HIDDEN_DIM,
                output_dim=OUTPUT_DIM):
    """Deterministic init mirroring PyTorch's U(-1/sqrt(H), 1/sqrt(H))."""
    k = 1.0 / jnp.sqrt(jnp.float32(hidden_dim))
    ks = jax.random.split(key, 6)
    u = lambda kk, shape: jax.random.uniform(
        kk, shape, dtype=jnp.float32, minval=-k, maxval=k)
    return dict(
        w_ih=u(ks[0], (4 * hidden_dim, input_dim)),
        w_hh=u(ks[1], (4 * hidden_dim, hidden_dim)),
        b_ih=u(ks[2], (4 * hidden_dim,)),
        b_hh=u(ks[3], (4 * hidden_dim,)),
        w_fc=u(ks[4], (output_dim, hidden_dim)),
        b_fc=u(ks[5], (output_dim,)),
    )


def prepare_params(params, hidden_pad=HIDDEN_PAD, out_pad=OUT_PAD,
                   matmul_dtype=jnp.bfloat16):
    """One-time preprocessing (cache the result; do NOT redo per call):
    transpose weights to row-major RHS layout, combine the two LSTM biases,
    zero-pad each gate block from H to Hp=128 lanes (and W_hh rows / fc
    rows+cols) so all per-step slices are whole-vreg, fold the x2
    "tanh-as-sigmoid" scale into the g-gate columns, and cast MXU operands to
    bf16 (f32 accumulation happens in-kernel). The x2 scale is a power of two,
    so bf16 quantization commutes with it and semantics are preserved."""
    H = params["w_hh"].shape[1]
    O = params["w_fc"].shape[0]
    Hp = hidden_pad

    def pad_gate_cols(w_t):
        # (rows, 4H) -> (rows, 4Hp); g-gate columns pre-scaled by 2.
        blocks = []
        for k, scale in enumerate((1.0, 1.0, 2.0, 1.0)):  # i, f, g, o
            blk = w_t[:, k * H:(k + 1) * H] * scale
            blocks.append(jnp.pad(blk, ((0, 0), (0, Hp - H))))
        return jnp.concatenate(blocks, axis=1)

    wih_t = pad_gate_cols(params["w_ih"].T.astype(jnp.float32))      # (D, 4Hp)
    whh_t = params["w_hh"].T.astype(jnp.float32)                     # (H, 4H)
    whh_t = jnp.pad(whh_t, ((0, Hp - H), (0, 0)))                    # zero rows
    whh_t = pad_gate_cols(whh_t)                                     # (Hp, 4Hp)
    b = pad_gate_cols(
        (params["b_ih"] + params["b_hh"]).astype(jnp.float32)[None, :])

    wfc = params["w_fc"].T.astype(jnp.float32)                       # (H, O)
    wfc = jnp.pad(wfc, ((0, Hp - H), (0, out_pad - O)))              # (Hp, Op)
    bfc = jnp.pad(params["b_fc"].astype(jnp.float32),
                  (0, out_pad - O))[None, :]                         # (1, Op)

    return dict(
        wih=wih_t.astype(matmul_dtype),
        whh=whh_t.astype(matmul_dtype),
        b=b,                              # (1, 4Hp) f32
        wfc=wfc.astype(matmul_dtype),     # (Hp, Op) bf16
        bfc=bfc,                          # (1, Op) f32
    )


@jax.jit
def drone_movement_forward(x, prep):
    """x: (B, T, D) float32 (PyTorch batch_first layout). Returns (B, O)."""
    B, T, D = x.shape
    Op = prep["wfc"].shape[1]
    nb = pl.cdiv(B, BATCH_TILE)
    Bp = nb * BATCH_TILE

    # Time-major within each batch tile: element (n, t*BB + i, d) = x[n*BB+i, t, d].
    # Tiny (B*T*D) data reshuffle; fused by XLA under jit.
    xt = jnp.transpose(x, (1, 0, 2))                             # (T, B, D)
    xt = jnp.pad(xt, ((0, 0), (0, Bp - B), (0, 0)))              # (T, Bp, D)
    xt = (xt.reshape(T, nb, BATCH_TILE, D)
            .transpose(1, 0, 2, 3)
            .reshape(nb, T * BATCH_TILE, D)
            .astype(prep["wih"].dtype))

    out_padded = pl.pallas_call(
        lstm_fc_kernel,
        grid=(nb,),
        in_specs=[
            # Per-tile input block; leading (squeezed) dim indexed by the grid.
            pl.BlockSpec((None, T * BATCH_TILE, D), lambda b: (b, 0, 0)),
            # Weights: full blocks, constant index map (stay resident in VMEM).
            pl.BlockSpec(prep["wih"].shape, lambda b: (0, 0)),
            pl.BlockSpec(prep["whh"].shape, lambda b: (0, 0)),
            pl.BlockSpec(prep["b"].shape, lambda b: (0, 0)),
            pl.BlockSpec(prep["wfc"].shape, lambda b: (0, 0)),
            pl.BlockSpec(prep["bfc"].shape, lambda b: (0, 0)),
        ],
        out_specs=pl.BlockSpec((BATCH_TILE, Op), lambda b: (b, 0)),
        out_shape=jax.ShapeDtypeStruct((Bp, Op), jnp.float32),
        compiler_params=pltpu.CompilerParams(
            dimension_semantics=("parallel",)),
    )(xt, prep["wih"], prep["whh"], prep["b"], prep["wfc"], prep["bfc"])

    return out_padded[:B, :OUTPUT_DIM]


def reference_forward(x, params, matmul_dtype=jnp.float32):
    """Pure-JAX reference matching torch.nn.LSTM + Linear semantics.
    matmul_dtype lets the reference mirror the kernel's bf16 MXU inputs
    (with f32 accumulation) for a tight numerical comparison."""
    B, T, D = x.shape
    H = params["w_hh"].shape[1]
    wih_t = params["w_ih"].T.astype(matmul_dtype)
    whh_t = params["w_hh"].T.astype(matmul_dtype)
    b = params["b_ih"] + params["b_hh"]

    def step(carry, x_t):
        h, c = carry
        gates = (
            jnp.dot(x_t.astype(matmul_dtype), wih_t,
                    preferred_element_type=jnp.float32)
            + jnp.dot(h.astype(matmul_dtype), whh_t,
                      preferred_element_type=jnp.float32)
            + b
        )
        i_g = jax.nn.sigmoid(gates[:, 0:H])
        f_g = jax.nn.sigmoid(gates[:, H:2 * H])
        g_g = jnp.tanh(gates[:, 2 * H:3 * H])
        o_g = jax.nn.sigmoid(gates[:, 3 * H:4 * H])
        c_new = f_g * c + i_g * g_g
        h_new = o_g * jnp.tanh(c_new)
        return (h_new, c_new), None

    h0 = jnp.zeros((B, H), jnp.float32)
    c0 = jnp.zeros((B, H), jnp.float32)
    (h_last, _), _ = lax.scan(step, (h0, c0), jnp.transpose(x, (1, 0, 2)))
    wfc_t = params["w_fc"].T.astype(matmul_dtype)
    return (
        jnp.dot(h_last.astype(matmul_dtype), wfc_t,
                preferred_element_type=jnp.float32)
        + params["b_fc"]
    )


if __name__ == "__main__":
    key = jax.random.PRNGKey(0)
    k_param, k_x = jax.random.split(key)

    B, T = 2, 8
    x = jax.random.normal(k_x, (B, T, INPUT_DIM), dtype=jnp.float32)
    params = make_params(k_param)
    prep = prepare_params(params)  # one-time preprocessing, reused every call

    out = drone_movement_forward(x, prep)
    out = jax.block_until_ready(out)
    assert out.shape == (B, OUTPUT_DIM), out.shape

    # Tight check vs a reference using matching bf16 MXU-input precision.
    ref_matched = reference_forward(x, params, matmul_dtype=jnp.bfloat16)
    assert jnp.allclose(out, ref_matched, atol=2e-3, rtol=2e-3), (
        "Pallas output mismatch vs matched-precision reference")

    # Loose sanity check vs the full-f32 PyTorch-semantics reference.
    ref_f32 = reference_forward(x, params)
    assert jnp.allclose(out, ref_f32, atol=5e-2, rtol=5e-2), (
        "Pallas output mismatch vs f32 reference")

    print("KERNEL_OK")
</pallas_src>

<mosaic_0001>
module attributes {stable_mosaic.version = 11 : i64} {
  func.func @lstm_fc_kernel(%arg0: i32, %arg1: memref<1x64x4xbf16, #tpu.memory_space<vmem>>, %arg2: memref<4x512xbf16, #tpu.memory_space<vmem>>, %arg3: memref<128x512xbf16, #tpu.memory_space<vmem>>, %arg4: memref<1x512xf32, #tpu.memory_space<vmem>>, %arg5: memref<128x128xbf16, #tpu.memory_space<vmem>>, %arg6: memref<1x128xf32, #tpu.memory_space<vmem>>, %arg7: memref<8x128xf32, #tpu.memory_space<vmem>>) attributes {dimension_semantics = [#tpu.dimension_semantics<parallel>], iteration_bounds = array<i64: 1>, scalar_prefetch = 0 : i64, scratch_operands = 0 : i64, tpu.core_type = #tpu.core_type<tc>, window_params = [{transform_indices = @transform_0, window_bounds = array<i64: 1, 64, 4>}, {pipeline_mode = #tpu.pipeline_mode<synchronous>, transform_indices = @transform_1, window_bounds = array<i64: 4, 512>}, {pipeline_mode = #tpu.pipeline_mode<synchronous>, transform_indices = @transform_2, window_bounds = array<i64: 128, 512>}, {pipeline_mode = #tpu.pipeline_mode<synchronous>, transform_indices = @transform_3, window_bounds = array<i64: 1, 512>}, {pipeline_mode = #tpu.pipeline_mode<synchronous>, transform_indices = @transform_4, window_bounds = array<i64: 128, 128>}, {pipeline_mode = #tpu.pipeline_mode<synchronous>, transform_indices = @transform_5, window_bounds = array<i64: 1, 128>}, {transform_indices = @transform_6, window_bounds = array<i64: 8, 128>}]} {
    %c0 = arith.constant 0 : index
    %c0_0 = arith.constant 0 : index
    %0 = vector.load %arg3[%c0, %c0_0] : memref<128x512xbf16, #tpu.memory_space<vmem>>, vector<128x512xbf16>
    %c0_1 = arith.constant 0 : index
    %c0_2 = arith.constant 0 : index
    %c0_3 = arith.constant 0 : index
    %1 = vector.load %arg1[%c0_1, %c0_2, %c0_3] : memref<1x64x4xbf16, #tpu.memory_space<vmem>>, vector<1x64x4xbf16>
    %2 = vector.shape_cast %1 : vector<1x64x4xbf16> to vector<64x4xbf16>
    %c0_4 = arith.constant 0 : index
    %c0_5 = arith.constant 0 : index
    %3 = vector.load %arg2[%c0_4, %c0_5] : memref<4x512xbf16, #tpu.memory_space<vmem>>, vector<4x512xbf16>
    %cst = arith.constant dense<0.000000e+00> : vector<64x512xf32>
    %4 = tpu.matmul %2, %3, %cst {dimension_numbers = #tpu.dot_dimension_numbers<[1], [0], [0], [1], [0, 0, 1, 1], [], []>} : vector<64x4xbf16>, vector<4x512xbf16>, vector<64x512xf32> -> vector<64x512xf32>
    %c0_6 = arith.constant 0 : index
    %c0_7 = arith.constant 0 : index
    %5 = vector.load %arg4[%c0_6, %c0_7] : memref<1x512xf32, #tpu.memory_space<vmem>>, vector<1x512xf32>
    %6 = vector.broadcast %5 : vector<1x512xf32> to vector<64x512xf32>
    %7 = arith.addf %4, %6 : vector<64x512xf32>
    %cst_8 = arith.constant 0.000000e+00 : bf16
    %8 = vector.broadcast %cst_8 : bf16 to vector<8x128xbf16>
    %cst_9 = arith.constant 0.000000e+00 : f32
    %9 = vector.broadcast %cst_9 : f32 to vector<8x128xf32>
    %10 = vector.extract_strided_slice %7 {offsets = [0, 0], sizes = [8, 512], strides = [1, 1]} : vector<64x512xf32> to vector<8x512xf32>
    %cst_10 = arith.constant dense<0.000000e+00> : vector<8x512xf32>
    %11 = tpu.matmul %8, %0, %cst_10 {dimension_numbers = #tpu.dot_dimension_numbers<[1], [0], [0], [1], [0, 0, 1, 1], [], []>} : vector<8x128xbf16>, vector<128x512xbf16>, vector<8x512xf32> -> vector<8x512xf32>
    %12 = arith.addf %10, %11 : vector<8x512xf32>
    %13 = arith.negf %12 : vector<8x512xf32>
    %14 = math.exp %13 : vector<8x512xf32>
    %cst_11 = arith.constant 1.000000e+00 : f32
    %15 = vector.broadcast %cst_11 : f32 to vector<8x512xf32>
    %16 = arith.addf %15, %14 : vector<8x512xf32>
    %17 = arith.divf %15, %16 : vector<8x512xf32>
    %18 = vector.extract_strided_slice %17 {offsets = [0, 0], sizes = [8, 128], strides = [1, 1]} : vector<8x512xf32> to vector<8x128xf32>
    %19 = vector.extract_strided_slice %17 {offsets = [0, 128], sizes = [8, 128], strides = [1, 1]} : vector<8x512xf32> to vector<8x128xf32>
    %20 = vector.extract_strided_slice %17 {offsets = [0, 256], sizes = [8, 128], strides = [1, 1]} : vector<8x512xf32> to vector<8x128xf32>
    %cst_12 = arith.constant 2.000000e+00 : f32
    %21 = vector.broadcast %cst_12 : f32 to vector<8x128xf32>
    %22 = arith.mulf %21, %20 : vector<8x128xf32>
    %cst_13 = arith.constant 1.000000e+00 : f32
    %23 = vector.broadcast %cst_13 : f32 to vector<8x128xf32>
    %24 = arith.subf %22, %23 : vector<8x128xf32>
    %25 = vector.extract_strided_slice %17 {offsets = [0, 384], sizes = [8, 128], strides = [1, 1]} : vector<8x512xf32> to vector<8x128xf32>
    %26 = arith.mulf %19, %9 : vector<8x128xf32>
    %27 = arith.mulf %18, %24 : vector<8x128xf32>
    %28 = arith.addf %26, %27 : vector<8x128xf32>
    %29 = math.tanh %28 : vector<8x128xf32>
    %30 = arith.mulf %25, %29 : vector<8x128xf32>
    %31 = arith.truncf %30 : vector<8x128xf32> to vector<8x128xbf16>
    %32 = vector.extract_strided_slice %7 {offsets = [8, 0], sizes = [8, 512], strides = [1, 1]} : vector<64x512xf32> to vector<8x512xf32>
    %cst_14 = arith.constant dense<0.000000e+00> : vector<8x512xf32>
    %33 = tpu.matmul %31, %0, %cst_14 {dimension_numbers = #tpu.dot_dimension_numbers<[1], [0], [0], [1], [0, 0, 1, 1], [], []>} : vector<8x128xbf16>, vector<128x512xbf16>, vector<8x512xf32> -> vector<8x512xf32>
    %34 = arith.addf %32, %33 : vector<8x512xf32>
    %35 = arith.negf %34 : vector<8x512xf32>
    %36 = math.exp %35 : vector<8x512xf32>
    %cst_15 = arith.constant 1.000000e+00 : f32
    %37 = vector.broadcast %cst_15 : f32 to vector<8x512xf32>
    %38 = arith.addf %37, %36 : vector<8x512xf32>
    %39 = arith.divf %37, %38 : vector<8x512xf32>
    %40 = vector.extract_strided_slice %39 {offsets = [0, 0], sizes = [8, 128], strides = [1, 1]} : vector<8x512xf32> to vector<8x128xf32>
    %41 = vector.extract_strided_slice %39 {offsets = [0, 128], sizes = [8, 128], strides = [1, 1]} : vector<8x512xf32> to vector<8x128xf32>
    %42 = vector.extract_strided_slice %39 {offsets = [0, 256], sizes = [8, 128], strides = [1, 1]} : vector<8x512xf32> to vector<8x128xf32>
    %cst_16 = arith.constant 2.000000e+00 : f32
    %43 = vector.broadcast %cst_16 : f32 to vector<8x128xf32>
    %44 = arith.mulf %43, %42 : vector<8x128xf32>
    %cst_17 = arith.constant 1.000000e+00 : f32
    %45 = vector.broadcast %cst_17 : f32 to vector<8x128xf32>
    %46 = arith.subf %44, %45 : vector<8x128xf32>
    %47 = vector.extract_strided_slice %39 {offsets = [0, 384], sizes = [8, 128], strides = [1, 1]} : vector<8x512xf32> to vector<8x128xf32>
    %48 = arith.mulf %41, %28 : vector<8x128xf32>
    %49 = arith.mulf %40, %46 : vector<8x128xf32>
    %50 = arith.addf %48, %49 : vector<8x128xf32>
    %51 = math.tanh %50 : vector<8x128xf32>
    %52 = arith.mulf %47, %51 : vector<8x128xf32>
    %53 = arith.truncf %52 : vector<8x128xf32> to vector<8x128xbf16>
    %54 = vector.extract_strided_slice %7 {offsets = [16, 0], sizes = [8, 512], strides = [1, 1]} : vector<64x512xf32> to vector<8x512xf32>
    %cst_18 = arith.constant dense<0.000000e+00> : vector<8x512xf32>
    %55 = tpu.matmul %53, %0, %cst_18 {dimension_numbers = #tpu.dot_dimension_numbers<[1], [0], [0], [1], [0, 0, 1, 1], [], []>} : vector<8x128xbf16>, vector<128x512xbf16>, vector<8x512xf32> -> vector<8x512xf32>
    %56 = arith.addf %54, %55 : vector<8x512xf32>
    %57 = arith.negf %56 : vector<8x512xf32>
    %58 = math.exp %57 : vector<8x512xf32>
    %cst_19 = arith.constant 1.000000e+00 : f32
    %59 = vector.broadcast %cst_19 : f32 to vector<8x512xf32>
    %60 = arith.addf %59, %58 : vector<8x512xf32>
    %61 = arith.divf %59, %60 : vector<8x512xf32>
    %62 = vector.extract_strided_slice %61 {offsets = [0, 0], sizes = [8, 128], strides = [1, 1]} : vector<8x512xf32> to vector<8x128xf32>
    %63 = vector.extract_strided_slice %61 {offsets = [0, 128], sizes = [8, 128], strides = [1, 1]} : vector<8x512xf32> to vector<8x128xf32>
    %64 = vector.extract_strided_slice %61 {offsets = [0, 256], sizes = [8, 128], strides = [1, 1]} : vector<8x512xf32> to vector<8x128xf32>
    %cst_20 = arith.constant 2.000000e+00 : f32
    %65 = vector.broadcast %cst_20 : f32 to vector<8x128xf32>
    %66 = arith.mulf %65, %64 : vector<8x128xf32>
    %cst_21 = arith.constant 1.000000e+00 : f32
    %67 = vector.broadcast %cst_21 : f32 to vector<8x128xf32>
    %68 = arith.subf %66, %67 : vector<8x128xf32>
    %69 = vector.extract_strided_slice %61 {offsets = [0, 384], sizes = [8, 128], strides = [1, 1]} : vector<8x512xf32> to vector<8x128xf32>
    %70 = arith.mulf %63, %50 : vector<8x128xf32>
    %71 = arith.mulf %62, %68 : vector<8x128xf32>
    %72 = arith.addf %70, %71 : vector<8x128xf32>
    %73 = math.tanh %72 : vector<8x128xf32>
    %74 = arith.mulf %69, %73 : vector<8x128xf32>
    %75 = arith.truncf %74 : vector<8x128xf32> to vector<8x128xbf16>
    %76 = vector.extract_strided_slice %7 {offsets = [24, 0], sizes = [8, 512], strides = [1, 1]} : vector<64x512xf32> to vector<8x512xf32>
    %cst_22 = arith.constant dense<0.000000e+00> : vector<8x512xf32>
    %77 = tpu.matmul %75, %0, %cst_22 {dimension_numbers = #tpu.dot_dimension_numbers<[1], [0], [0], [1], [0, 0, 1, 1], [], []>} : vector<8x128xbf16>, vector<128x512xbf16>, vector<8x512xf32> -> vector<8x512xf32>
    %78 = arith.addf %76, %77 : vector<8x512xf32>
    %79 = arith.negf %78 : vector<8x512xf32>
    %80 = math.exp %79 : vector<8x512xf32>
    %cst_23 = arith.constant 1.000000e+00 : f32
    %81 = vector.broadcast %cst_23 : f32 to vector<8x512xf32>
    %82 = arith.addf %81, %80 : vector<8x512xf32>
    %83 = arith.divf %81, %82 : vector<8x512xf32>
    %84 = vector.extract_strided_slice %83 {offsets = [0, 0], sizes = [8, 128], strides = [1, 1]} : vector<8x512xf32> to vector<8x128xf32>
    %85 = vector.extract_strided_slice %83 {offsets = [0, 128], sizes = [8, 128], strides = [1, 1]} : vector<8x512xf32> to vector<8x128xf32>
    %86 = vector.extract_strided_slice %83 {offsets = [0, 256], sizes = [8, 128], strides = [1, 1]} : vector<8x512xf32> to vector<8x128xf32>
    %cst_24 = arith.constant 2.000000e+00 : f32
    %87 = vector.broadcast %cst_24 : f32 to vector<8x128xf32>
    %88 = arith.mulf %87, %86 : vector<8x128xf32>
    %cst_25 = arith.constant 1.000000e+00 : f32
    %89 = vector.broadcast %cst_25 : f32 to vector<8x128xf32>
    %90 = arith.subf %88, %89 : vector<8x128xf32>
    %91 = vector.extract_strided_slice %83 {offsets = [0, 384], sizes = [8, 128], strides = [1, 1]} : vector<8x512xf32> to vector<8x128xf32>
    %92 = arith.mulf %85, %72 : vector<8x128xf32>
    %93 = arith.mulf %84, %90 : vector<8x128xf32>
    %94 = arith.addf %92, %93 : vector<8x128xf32>
    %95 = math.tanh %94 : vector<8x128xf32>
    %96 = arith.mulf %91, %95 : vector<8x128xf32>
    %97 = arith.truncf %96 : vector<8x128xf32> to vector<8x128xbf16>
    %98 = vector.extract_strided_slice %7 {offsets = [32, 0], sizes = [8, 512], strides = [1, 1]} : vector<64x512xf32> to vector<8x512xf32>
    %cst_26 = arith.constant dense<0.000000e+00> : vector<8x512xf32>
    %99 = tpu.matmul %97, %0, %cst_26 {dimension_numbers = #tpu.dot_dimension_numbers<[1], [0], [0], [1], [0, 0, 1, 1], [], []>} : vector<8x128xbf16>, vector<128x512xbf16>, vector<8x512xf32> -> vector<8x512xf32>
    %100 = arith.addf %98, %99 : vector<8x512xf32>
    %101 = arith.negf %100 : vector<8x512xf32>
    %102 = math.exp %101 : vector<8x512xf32>
    %cst_27 = arith.constant 1.000000e+00 : f32
    %103 = vector.broadcast %cst_27 : f32 to vector<8x512xf32>
    %104 = arith.addf %103, %102 : vector<8x512xf32>
    %105 = arith.divf %103, %104 : vector<8x512xf32>
    %106 = vector.extract_strided_slice %105 {offsets = [0, 0], sizes = [8, 128], strides = [1, 1]} : vector<8x512xf32> to vector<8x128xf32>
    %107 = vector.extract_strided_slice %105 {offsets = [0, 128], sizes = [8, 128], strides = [1, 1]} : vector<8x512xf32> to vector<8x128xf32>
    %108 = vector.extract_strided_slice %105 {offsets = [0, 256], sizes = [8, 128], strides = [1, 1]} : vector<8x512xf32> to vector<8x128xf32>
    %cst_28 = arith.constant 2.000000e+00 : f32
    %109 = vector.broadcast %cst_28 : f32 to vector<8x128xf32>
    %110 = arith.mulf %109, %108 : vector<8x128xf32>
    %cst_29 = arith.constant 1.000000e+00 : f32
    %111 = vector.broadcast %cst_29 : f32 to vector<8x128xf32>
    %112 = arith.subf %110, %111 : vector<8x128xf32>
    %113 = vector.extract_strided_slice %105 {offsets = [0, 384], sizes = [8, 128], strides = [1, 1]} : vector<8x512xf32> to vector<8x128xf32>
    %114 = arith.mulf %107, %94 : vector<8x128xf32>
    %115 = arith.mulf %106, %112 : vector<8x128xf32>
    %116 = arith.addf %114, %115 : vector<8x128xf32>
    %117 = math.tanh %116 : vector<8x128xf32>
    %118 = arith.mulf %113, %117 : vector<8x128xf32>
    %119 = arith.truncf %118 : vector<8x128xf32> to vector<8x128xbf16>
    %120 = vector.extract_strided_slice %7 {offsets = [40, 0], sizes = [8, 512], strides = [1, 1]} : vector<64x512xf32> to vector<8x512xf32>
    %cst_30 = arith.constant dense<0.000000e+00> : vector<8x512xf32>
    %121 = tpu.matmul %119, %0, %cst_30 {dimension_numbers = #tpu.dot_dimension_numbers<[1], [0], [0], [1], [0, 0, 1, 1], [], []>} : vector<8x128xbf16>, vector<128x512xbf16>, vector<8x512xf32> -> vector<8x512xf32>
    %122 = arith.addf %120, %121 : vector<8x512xf32>
    %123 = arith.negf %122 : vector<8x512xf32>
    %124 = math.exp %123 : vector<8x512xf32>
    %cst_31 = arith.constant 1.000000e+00 : f32
    %125 = vector.broadcast %cst_31 : f32 to vector<8x512xf32>
    %126 = arith.addf %125, %124 : vector<8x512xf32>
    %127 = arith.divf %125, %126 : vector<8x512xf32>
    %128 = vector.extract_strided_slice %127 {offsets = [0, 0], sizes = [8, 128], strides = [1, 1]} : vector<8x512xf32> to vector<8x128xf32>
    %129 = vector.extract_strided_slice %127 {offsets = [0, 128], sizes = [8, 128], strides = [1, 1]} : vector<8x512xf32> to vector<8x128xf32>
    %130 = vector.extract_strided_slice %127 {offsets = [0, 256], sizes = [8, 128], strides = [1, 1]} : vector<8x512xf32> to vector<8x128xf32>
    %cst_32 = arith.constant 2.000000e+00 : f32
    %131 = vector.broadcast %cst_32 : f32 to vector<8x128xf32>
    %132 = arith.mulf %131, %130 : vector<8x128xf32>
    %cst_33 = arith.constant 1.000000e+00 : f32
    %133 = vector.broadcast %cst_33 : f32 to vector<8x128xf32>
    %134 = arith.subf %132, %133 : vector<8x128xf32>
    %135 = vector.extract_strided_slice %127 {offsets = [0, 384], sizes = [8, 128], strides = [1, 1]} : vector<8x512xf32> to vector<8x128xf32>
    %136 = arith.mulf %129, %116 : vector<8x128xf32>
    %137 = arith.mulf %128, %134 : vector<8x128xf32>
    %138 = arith.addf %136, %137 : vector<8x128xf32>
    %139 = math.tanh %138 : vector<8x128xf32>
    %140 = arith.mulf %135, %139 : vector<8x128xf32>
    %141 = arith.truncf %140 : vector<8x128xf32> to vector<8x128xbf16>
    %142 = vector.extract_strided_slice %7 {offsets = [48, 0], sizes = [8, 512], strides = [1, 1]} : vector<64x512xf32> to vector<8x512xf32>
    %cst_34 = arith.constant dense<0.000000e+00> : vector<8x512xf32>
    %143 = tpu.matmul %141, %0, %cst_34 {dimension_numbers = #tpu.dot_dimension_numbers<[1], [0], [0], [1], [0, 0, 1, 1], [], []>} : vector<8x128xbf16>, vector<128x512xbf16>, vector<8x512xf32> -> vector<8x512xf32>
    %144 = arith.addf %142, %143 : vector<8x512xf32>
    %145 = arith.negf %144 : vector<8x512xf32>
    %146 = math.exp %145 : vector<8x512xf32>
    %cst_35 = arith.constant 1.000000e+00 : f32
    %147 = vector.broadcast %cst_35 : f32 to vector<8x512xf32>
    %148 = arith.addf %147, %146 : vector<8x512xf32>
    %149 = arith.divf %147, %148 : vector<8x512xf32>
    %150 = vector.extract_strided_slice %149 {offsets = [0, 0], sizes = [8, 128], strides = [1, 1]} : vector<8x512xf32> to vector<8x128xf32>
    %151 = vector.extract_strided_slice %149 {offsets = [0, 128], sizes = [8, 128], strides = [1, 1]} : vector<8x512xf32> to vector<8x128xf32>
    %152 = vector.extract_strided_slice %149 {offsets = [0, 256], sizes = [8, 128], strides = [1, 1]} : vector<8x512xf32> to vector<8x128xf32>
    %cst_36 = arith.constant 2.000000e+00 : f32
    %153 = vector.broadcast %cst_36 : f32 to vector<8x128xf32>
    %154 = arith.mulf %153, %152 : vector<8x128xf32>
    %cst_37 = arith.constant 1.000000e+00 : f32
    %155 = vector.broadcast %cst_37 : f32 to vector<8x128xf32>
    %156 = arith.subf %154, %155 : vector<8x128xf32>
    %157 = vector.extract_strided_slice %149 {offsets = [0, 384], sizes = [8, 128], strides = [1, 1]} : vector<8x512xf32> to vector<8x128xf32>
    %158 = arith.mulf %151, %138 : vector<8x128xf32>
    %159 = arith.mulf %150, %156 : vector<8x128xf32>
    %160 = arith.addf %158, %159 : vector<8x128xf32>
    %161 = math.tanh %160 : vector<8x128xf32>
    %162 = arith.mulf %157, %161 : vector<8x128xf32>
    %163 = arith.truncf %162 : vector<8x128xf32> to vector<8x128xbf16>
    %164 = vector.extract_strided_slice %7 {offsets = [56, 0], sizes = [8, 512], strides = [1, 1]} : vector<64x512xf32> to vector<8x512xf32>
    %cst_38 = arith.constant dense<0.000000e+00> : vector<8x512xf32>
    %165 = tpu.matmul %163, %0, %cst_38 {dimension_numbers = #tpu.dot_dimension_numbers<[1], [0], [0], [1], [0, 0, 1, 1], [], []>} : vector<8x128xbf16>, vector<128x512xbf16>, vector<8x512xf32> -> vector<8x512xf32>
    %166 = arith.addf %164, %165 : vector<8x512xf32>
    %167 = arith.negf %166 : vector<8x512xf32>
    %168 = math.exp %167 : vector<8x512xf32>
    %cst_39 = arith.constant 1.000000e+00 : f32
    %169 = vector.broadcast %cst_39 : f32 to vector<8x512xf32>
    %170 = arith.addf %169, %168 : vector<8x512xf32>
    %171 = arith.divf %169, %170 : vector<8x512xf32>
    %172 = vector.extract_strided_slice %171 {offsets = [0, 0], sizes = [8, 128], strides = [1, 1]} : vector<8x512xf32> to vector<8x128xf32>
    %173 = vector.extract_strided_slice %171 {offsets = [0, 128], sizes = [8, 128], strides = [1, 1]} : vector<8x512xf32> to vector<8x128xf32>
    %174 = vector.extract_strided_slice %171 {offsets = [0, 256], sizes = [8, 128], strides = [1, 1]} : vector<8x512xf32> to vector<8x128xf32>
    %cst_40 = arith.constant 2.000000e+00 : f32
    %175 = vector.broadcast %cst_40 : f32 to vector<8x128xf32>
    %176 = arith.mulf %175, %174 : vector<8x128xf32>
    %cst_41 = arith.constant 1.000000e+00 : f32
    %177 = vector.broadcast %cst_41 : f32 to vector<8x128xf32>
    %178 = arith.subf %176, %177 : vector<8x128xf32>
    %179 = vector.extract_strided_slice %171 {offsets = [0, 384], sizes = [8, 128], strides = [1, 1]} : vector<8x512xf32> to vector<8x128xf32>
    %180 = arith.mulf %173, %160 : vector<8x128xf32>
    %181 = arith.mulf %172, %178 : vector<8x128xf32>
    %182 = arith.addf %180, %181 : vector<8x128xf32>
    %183 = math.tanh %182 : vector<8x128xf32>
    %184 = arith.mulf %179, %183 : vector<8x128xf32>
    %185 = arith.truncf %184 : vector<8x128xf32> to vector<8x128xbf16>
    %c0_42 = arith.constant 0 : index
    %c0_43 = arith.constant 0 : index
    %186 = vector.load %arg5[%c0_42, %c0_43] : memref<128x128xbf16, #tpu.memory_space<vmem>>, vector<128x128xbf16>
    %cst_44 = arith.constant dense<0.000000e+00> : vector<8x128xf32>
    %187 = tpu.matmul %185, %186, %cst_44 {dimension_numbers = #tpu.dot_dimension_numbers<[1], [0], [0], [1], [0, 0, 1, 1], [], []>} : vector<8x128xbf16>, vector<128x128xbf16>, vector<8x128xf32> -> vector<8x128xf32>
    %c0_45 = arith.constant 0 : index
    %c0_46 = arith.constant 0 : index
    %188 = vector.load %arg6[%c0_45, %c0_46] : memref<1x128xf32, #tpu.memory_space<vmem>>, vector<1x128xf32>
    %189 = vector.broadcast %188 : vector<1x128xf32> to vector<8x128xf32>
    %190 = arith.addf %187, %189 : vector<8x128xf32>
    %c0_47 = arith.constant 0 : index
    %c0_48 = arith.constant 0 : index
    %191 = vector.load %arg7[%c0_47, %c0_48] : memref<8x128xf32, #tpu.memory_space<vmem>>, vector<8x128xf32>
    tpu.vector_store %arg7[%c0_47, %c0_48], %190 {strides = array<i32>} : memref<8x128xf32, #tpu.memory_space<vmem>>, vector<8x128xf32>,
    return
  }
  func.func @transform_0(%arg0: i32) -> (i32, i32, i32) {
    %c0_i32 = arith.constant 0 : i32
    %c0_i32_0 = arith.constant 0 : i32
    %c0_i32_1 = arith.constant 0 : i32
    return %arg0, %c0_i32, %c0_i32_0 : i32, i32, i32
  }
  func.func @transform_1(%arg0: i32) -> (i32, i32) {
    %c0_i32 = arith.constant 0 : i32
    %c0_i32_0 = arith.constant 0 : i32
    %c0_i32_1 = arith.constant 0 : i32
    return %c0_i32, %c0_i32_0 : i32, i32
  }
  func.func @transform_2(%arg0: i32) -> (i32, i32) {
    %c0_i32 = arith.constant 0 : i32
    %c0_i32_0 = arith.constant 0 : i32
    %c0_i32_1 = arith.constant 0 : i32
    return %c0_i32, %c0_i32_0 : i32, i32
  }
  func.func @transform_3(%arg0: i32) -> (i32, i32) {
    %c0_i32 = arith.constant 0 : i32
    %c0_i32_0 = arith.constant 0 : i32
    %c0_i32_1 = arith.constant 0 : i32
    return %c0_i32, %c0_i32_0 : i32, i32
  }
  func.func @transform_4(%arg0: i32) -> (i32, i32) {
    %c0_i32 = arith.constant 0 : i32
    %c0_i32_0 = arith.constant 0 : i32
    %c0_i32_1 = arith.constant 0 : i32
    return %c0_i32, %c0_i32_0 : i32, i32
  }
  func.func @transform_5(%arg0: i32) -> (i32, i32) {
    %c0_i32 = arith.constant 0 : i32
    %c0_i32_0 = arith.constant 0 : i32
    %c0_i32_1 = arith.constant 0 : i32
    return %c0_i32, %c0_i32_0 : i32, i32
  }
  func.func @transform_6(%arg0: i32) -> (i32, i32) {
    %c0_i32 = arith.constant 0 : i32
    %c0_i32_0 = arith.constant 0 : i32
    return %arg0, %c0_i32 : i32, i32
  }
}

</mosaic_0001>

<llo_original>
// kernel: drone_movement_forward.1
$region0: #{drone_movement_forward.1}
  #allocation0 [shape = 'u32[]', space=smem, size = 0x4, offset = 0x4, fixed_abs, tag = 'smem constant byte address 0x4 - core index']
  #allocation1 [shape = 'u32[72,128]{1,0:T(1,128)}', space=vmem, size = 0x9000, scoped, tag = 'internal scratch']
  %s0 = inlined_call_operand.vmem [shape: bf16[1,64,4], index: 0, kind: input, shape index: {}]
  %s1 = inlined_call_operand.hbm [shape: bf16[4,512], index: 1, kind: input, shape index: {}]
  %s2 = inlined_call_operand.hbm [shape: bf16[128,512], index: 2, kind: input, shape index: {}]
  %s3 = inlined_call_operand.hbm [shape: f32[1,512], index: 3, kind: input, shape index: {}]
  %s4 = inlined_call_operand.vmem [shape: bf16[128,128], index: 4, kind: input, shape index: {}]
  %s5 = inlined_call_operand.vmem [shape: f32[1,128], index: 5, kind: input, shape index: {}]
  %s6 = inlined_call_operand.vmem [shape: f32[8,128], index: 6, kind: output, shape index: {}]
  %s7 = sld [smem:[#allocation0]]
  $region46: #{drone_movement_forward.1} parent=0
    _
  %s9 = ssub.s32 1, %s7
  %s10 = scalar_select 0, %s9, %s7
  $region1: #{drone_movement_forward.1} parent=0
    #allocation2 [shape = 'u8[4096]{0}', space=vmem, size = 0x1000, scoped, tag = 'input window, operand 1, single buffered']
    #allocation3 [shape = 's32[1]{0}', space=sflag, size = 0x4, scoped, tag = 'scoped memory for drone_movement_forward.1']
    #allocation4 [shape = 'u8[131072]{0}', space=vmem, size = 0x20000, scoped, tag = 'input window, operand 2, single buffered']
    #allocation5 [shape = 's32[1]{0}', space=sflag, size = 0x4, scoped, tag = 'scoped memory for drone_movement_forward.1']
    #allocation6 [shape = 'u8[2048]{0}', space=vmem, size = 0x800, scoped, tag = 'input window, operand 3, single buffered']
    %11 = vsyncpa [#allocation3], 0
    %12 = vsyncpa [#allocation5], 0
    // Predicated region
    $region2: #{drone_movement_forward.1} parent=1 // pred_check
      _
    $region3: #{drone_movement_forward.1} parent=1 // pred_check_branch
      %14 = sbr.rel (0) target = $region5
    $region4: #{drone_movement_forward.1} parent=1 // pred_region
      _
    $region5: #{drone_movement_forward.1} parent=1 // pred_fallthru
      _
    // Predicated region
    $region6: #{drone_movement_forward.1} parent=1 // pred_check
      _
    $region7: #{drone_movement_forward.1} parent=1 // pred_check_branch
      %16 = sbr.rel (0) target = $region9
    $region8: #{drone_movement_forward.1} parent=1 // pred_region
      %18 = vsyncadd [#allocation3], 0
      %s20 = sshll.u32 %s1, 4
      %s21 = int_to_ptr.hbm [resolvable:$true] %s20
      %s22 = sshll.u32 [#allocation2], 4
      %s23 = int_to_ptr.vmem [resolvable:$true] %s22
      %25 = dma.hbm_to_vmem [thread:$0]  %s21, 128, %s23, [#allocation3]
    $region9: #{drone_movement_forward.1} parent=1 // pred_fallthru
      _
    // Predicated region
    $region10: #{drone_movement_forward.1} parent=1 // pred_check
      _
    $region11: #{drone_movement_forward.1} parent=1 // pred_check_branch
      %27 = sbr.rel (0) target = $region13
    $region12: #{drone_movement_forward.1} parent=1 // pred_region
      %29 = vsyncadd [#allocation5], 0
      %s30 = sshll.u32 %s2, 4
      %s31 = int_to_ptr.hbm [resolvable:$true] %s30
      %s32 = sshll.u32 [#allocation4], 4
      %s33 = int_to_ptr.vmem [resolvable:$true] %s32
      %38 = dma.hbm_to_vmem [thread:$0]  %s31, 4096, %s33, [#allocation5], 256, 256, 16
    $region13: #{drone_movement_forward.1} parent=1 // pred_fallthru
      _
    // Predicated region
    $region14: #{drone_movement_forward.1} parent=1 // pred_check
      _
    $region15: #{drone_movement_forward.1} parent=1 // pred_check_branch
      %40 = sbr.rel (0) target = $region17
    $region16: #{drone_movement_forward.1} parent=1 // pred_region
      %42 = vsyncadd [#allocation5], 0
      %s44 = sshll.u32 %s3, 4
      %s45 = int_to_ptr.hbm [resolvable:$true] %s44
      %s46 = sshll.u32 [#allocation6], 4
      %s47 = int_to_ptr.vmem [resolvable:$true] %s46
      %49 = dma.hbm_to_vmem [thread:$0]  %s45, 64, %s47, [#allocation5]
    $region17: #{drone_movement_forward.1} parent=1 // pred_fallthru
      _
    // Predicated region
    $region18: #{drone_movement_forward.1} parent=1 // pred_check
      _
    $region19: #{drone_movement_forward.1} parent=1 // pred_check_branch
      %51 = sbr.rel (0) target = $region21
    $region20: #{drone_movement_forward.1} parent=1 // pred_region
      _
    $region21: #{drone_movement_forward.1} parent=1 // pred_fallthru
      _
    // Predicated region
    $region22: #{drone_movement_forward.1} parent=1 // pred_check
      _
    $region23: #{drone_movement_forward.1} parent=1 // pred_check_branch
      %53 = sbr.rel (0) target = $region25
    $region24: #{drone_movement_forward.1} parent=1 // pred_region
      _
    $region25: #{drone_movement_forward.1} parent=1 // pred_fallthru
      _
    // Predicated region
    $region26: #{drone_movement_forward.1} parent=1 // pred_check
      _
    $region27: #{drone_movement_forward.1} parent=1 // pred_check_branch
      %55 = sbr.rel (0) target = $region29
    $region28: #{drone_movement_forward.1} parent=1 // pred_region
      %57 = dma.done [#allocation3], 128
    $region29: #{drone_movement_forward.1} parent=1 // pred_fallthru
      _
    // Predicated region
    $region30: #{drone_movement_forward.1} parent=1 // pred_check
      _
    $region31: #{drone_movement_forward.1} parent=1 // pred_check_branch
      %59 = sbr.rel (0) target = $region33
    $region32: #{drone_movement_forward.1} parent=1 // pred_region
      %61 = dma.done [#allocation5], 4096
    $region33: #{drone_movement_forward.1} parent=1 // pred_fallthru
      _
    // Predicated region
    $region34: #{drone_movement_forward.1} parent=1 // pred_check
      _
    $region35: #{drone_movement_forward.1} parent=1 // pred_check_branch
      %63 = sbr.rel (0) target = $region37
    $region36: #{drone_movement_forward.1} parent=1 // pred_region
      %65 = dma.done [#allocation5], 64
    $region37: #{drone_movement_forward.1} parent=1 // pred_fallthru
      _
    %v67 = vld [vmem:[#allocation4] sm:$0xff]
    %v68 = vld [vmem:[#allocation4 + $0x8] sm:$0xff]
    %v69 = vld [vmem:[#allocation4 + $0x10] sm:$0xff]
    %v70 = vld [vmem:[#allocation4 + $0x18] sm:$0xff]
    %v71 = vld [vmem:[#allocation4 + $0x20] sm:$0xff]
    %v72 = vld [vmem:[#allocation4 + $0x28] sm:$0xff]
    %v73 = vld [vmem:[#allocation4 + $0x30] sm:$0xff]
    %v74 = vld [vmem:[#allocation4 + $0x38] sm:$0xff]
    %v75 = vld [vmem:[#allocation4 + $0x40] sm:$0xff]
    %v76 = vld [vmem:[#allocation4 + $0x48] sm:$0xff]
    %v77 = vld [vmem:[#allocation4 + $0x50] sm:$0xff]
    %v78 = vld [vmem:[#allocation4 + $0x58] sm:$0xff]
    %v79 = vld [vmem:[#allocation4 + $0x60] sm:$0xff]
    %v80 = vld [vmem:[#allocation4 + $0x68] sm:$0xff]
    %v81 = vld [vmem:[#allocation4 + $0x70] sm:$0xff]
    %v82 = vld [vmem:[#allocation4 + $0x78] sm:$0xff]
    %v83 = vld [vmem:[#allocation4 + $0x80] sm:$0xff]
    %v84 = vld [vmem:[#allocation4 + $0x88] sm:$0xff]
    %v85 = vld [vmem:[#allocation4 + $0x90] sm:$0xff]
    %v86 = vld [vmem:[#allocation4 + $0x98] sm:$0xff]
    %v87 = vld [vmem:[#allocation4 + $0xa0] sm:$0xff]
    %v88 = vld [vmem:[#allocation4 + $0xa8] sm:$0xff]
    %v89 = vld [vmem:[#allocation4 + $0xb0] sm:$0xff]
    %v90 = vld [vmem:[#allocation4 + $0xb8] sm:$0xff]
    %v91 = vld [vmem:[#allocation4 + $0xc0] sm:$0xff]
    %v92 = vld [vmem:[#allocation4 + $0xc8] sm:$0xff]
    %v93 = vld [vmem:[#allocation4 + $0xd0] sm:$0xff]
    %v94 = vld [vmem:[#allocation4 + $0xd8] sm:$0xff]
    %v95 = vld [vmem:[#allocation4 + $0xe0] sm:$0xff]
    %v96 = vld [vmem:[#allocation4 + $0xe8] sm:$0xff]
    %v97 = vld [vmem:[#allocation4 + $0xf0] sm:$0xff]
    %v98 = vld [vmem:[#allocation4 + $0xf8] sm:$0xff]
    %v99 = vld [vmem:[%s0] sm:$0xf]
    %v100 = vld [vmem:[%s0 + $0x4] sm:$0xf]
    %v101 = vld [vmem:[%s0 + $0x8] sm:$0xf]
    %v102 = vld [vmem:[%s0 + $0xc] sm:$0xf]
    %v103 = vld [vmem:[%s0 + $0x10] sm:$0xf]
    %v104 = vld [vmem:[%s0 + $0x14] sm:$0xf]
    %v105 = vld [vmem:[%s0 + $0x18] sm:$0xf]
    %v106 = vld [vmem:[%s0 + $0x1c] sm:$0xf]
    %v107 = vld [vmem:[#allocation2] sm:$0xff]
    %v108 = vld [vmem:[#allocation6] sm:$0xf]
    %v110 = vperm.slane %v108, 0
    %v111 = vperm.slane %v108, 1
    %v112 = vperm.slane %v108, 2
    %v113 = vperm.slane %v108, 3
    %v126 = vunpack.c.l.b16 %v99
    %v127 = vunpack.c.l.b16 %v100
    %v128 = vunpack.c.l.b16 %v101
    %v129 = vunpack.c.l.b16 %v102
    %v130 = vunpack.c.l.b16 %v103
    %v131 = vunpack.c.l.b16 %v104
    %v132 = vunpack.c.l.b16 %v105
    %v133 = vunpack.c.l.b16 %v106
    %v134 = vpack.c.b16 %v127, %v126
    %v135 = vpack.c.b16 %v129, %v128
    %v136 = vpack.c.b16 %v131, %v130
    %v137 = vpack.c.b16 %v133, %v132
    %139 = vst [vmem:[#allocation1] ss:$4 sm:$0xff] %v107
    %v140 = vld.sshfl [vmem:[#allocation1] sm:$0xff pattern:$0x73625140]
    %v141 = vld.sshfl [vmem:[#allocation1 + $0x8] sm:$0xff pattern:$0x73625140]
    %v142 = vld.sshfl [vmem:[#allocation1 + $0x10] sm:$0xff pattern:$0x73625140]
    %v143 = vld.sshfl [vmem:[#allocation1 + $0x18] sm:$0xff pattern:$0x73625140]
    %vm144 = vcmask 31744
    %v146 = vsel %vm144, %v134, 0
    %v149 = vsel %vm144, %v135, 0
    %v152 = vsel %vm144, %v136, 0
    %v155 = vsel %vm144, %v137, 0
    %vm157 = vcmask 1041408
    %v158 = vsel %vm157, %v140, 0
    %v160 = vsel %vm157, %v141, 0
    %v162 = vsel %vm157, %v142, 0
    %v164 = vsel %vm157, %v143, 0
    %166 = vmatpush.bf16.msra.mxu0 0
    %167 = vmatpush.bf16.msra.mxu0 0
    %168 = vmatpush.bf16.msra.mxu0 0
    %169 = vmatpush.bf16.msra.mxu0 0
    %170 = vmatpush.bf16.msra.mxu0 0
    %171 = vmatpush.bf16.msra.mxu0 0
    %172 = vmatpush.bf16.msra.mxu0 0
    %173 = vmatpush.bf16.msra.mxu0 %v158
    %174 = vmatmul.bf16.gmra.mxu0 %v146
    %v175 = vpop.f32.mrf.mxu0
    %v176 = vadd.f32 %v110, %v175
    %v177 = vpop.f32.mrf.mxu0
    %v178 = vadd.f32 %v110, %v177
    %179 = vmatmul.bf16.gmra.mxu0 %v149
    %v180 = vpop.f32.mrf.mxu0
    %v181 = vadd.f32 %v110, %v180
    %v182 = vpop.f32.mrf.mxu0
    %v183 = vadd.f32 %v110, %v182
    %184 = vmatmul.bf16.gmra.mxu0 %v152
    %v185 = vpop.f32.mrf.mxu0
    %v186 = vadd.f32 %v110, %v185
    %v187 = vpop.f32.mrf.mxu0
    %v188 = vadd.f32 %v110, %v187
    %189 = vmatmul.bf16.gmra.mxu0 %v155
    %v190 = vpop.f32.mrf.mxu0
    %v191 = vadd.f32 %v110, %v190
    %v192 = vpop.f32.mrf.mxu0
    %v193 = vadd.f32 %v110, %v192
    %194 = vdwg.mxu0
    %195 = vmatpush.bf16.msra.mxu0 0
    %196 = vmatpush.bf16.msra.mxu0 0
    %197 = vmatpush.bf16.msra.mxu0 0
    %198 = vmatpush.bf16.msra.mxu0 0
    %199 = vmatpush.bf16.msra.mxu0 0
    %200 = vmatpush.bf16.msra.mxu0 0
    %201 = vmatpush.bf16.msra.mxu0 0
    %202 = vmatpush.bf16.msra.mxu0 %v160
    %203 = vmatmul.bf16.gmra.mxu0 %v146
    %v204 = vpop.f32.mrf.mxu0
    %v205 = vadd.f32 %v111, %v204
    %v206 = vpop.f32.mrf.mxu0
    %v207 = vadd.f32 %v111, %v206
    %208 = vmatmul.bf16.gmra.mxu0 %v149
    %v209 = vpop.f32.mrf.mxu0
    %v210 = vadd.f32 %v111, %v209
    %v211 = vpop.f32.mrf.mxu0
    %v212 = vadd.f32 %v111, %v211
    %213 = vmatmul.bf16.gmra.mxu0 %v152
    %v214 = vpop.f32.mrf.mxu0
    %v215 = vadd.f32 %v111, %v214
    %v216 = vpop.f32.mrf.mxu0
    %v217 = vadd.f32 %v111, %v216
    %218 = vmatmul.bf16.gmra.mxu0 %v155
    %v219 = vpop.f32.mrf.mxu0
    %v220 = vadd.f32 %v111, %v219
    %v221 = vpop.f32.mrf.mxu0
    %v222 = vadd.f32 %v111, %v221
    %223 = vdwg.mxu0
    %224 = vmatpush.bf16.msra.mxu0 0
    %225 = vmatpush.bf16.msra.mxu0 0
    %226 = vmatpush.bf16.msra.mxu0 0
    %227 = vmatpush.bf16.msra.mxu0 0
    %228 = vmatpush.bf16.msra.mxu0 0
    %229 = vmatpush.bf16.msra.mxu0 0
    %230 = vmatpush.bf16.msra.mxu0 0
    %231 = vmatpush.bf16.msra.mxu0 %v162
    %232 = vmatmul.bf16.gmra.mxu0 %v146
    %v233 = vpop.f32.mrf.mxu0
    %v234 = vadd.f32 %v112, %v233
    %v235 = vpop.f32.mrf.mxu0
    %v236 = vadd.f32 %v112, %v235
    %237 = vmatmul.bf16.gmra.mxu0 %v149
    %v238 = vpop.f32.mrf.mxu0
    %v239 = vadd.f32 %v112, %v238
    %v240 = vpop.f32.mrf.mxu0
    %v241 = vadd.f32 %v112, %v240
    %242 = vmatmul.bf16.gmra.mxu0 %v152
    %v243 = vpop.f32.mrf.mxu0
    %v244 = vadd.f32 %v112, %v243
    %v245 = vpop.f32.mrf.mxu0
    %v246 = vadd.f32 %v112, %v245
    %247 = vmatmul.bf16.gmra.mxu0 %v155
    %v248 = vpop.f32.mrf.mxu0
    %v249 = vadd.f32 %v112, %v248
    %v250 = vpop.f32.mrf.mxu0
    %v251 = vadd.f32 %v112, %v250
    %252 = vdwg.mxu0
    %253 = vmatpush.bf16.msra.mxu0 0
    %254 = vmatpush.bf16.msra.mxu0 0
    %255 = vmatpush.bf16.msra.mxu0 0
    %256 = vmatpush.bf16.msra.mxu0 0
    %257 = vmatpush.bf16.msra.mxu0 0
    %258 = vmatpush.bf16.msra.mxu0 0
    %259 = vmatpush.bf16.msra.mxu0 0
    %260 = vmatpush.bf16.msra.mxu0 %v164
    %261 = vmatmul.bf16.gmra.mxu0 %v146
    %v262 = vpop.f32.mrf.mxu0
    %v263 = vadd.f32 %v113, %v262
    %v264 = vpop.f32.mrf.mxu0
    %v265 = vadd.f32 %v113, %v264
    %266 = vmatmul.bf16.gmra.mxu0 %v149
    %v267 = vpop.f32.mrf.mxu0
    %v268 = vadd.f32 %v113, %v267
    %v269 = vpop.f32.mrf.mxu0
    %v270 = vadd.f32 %v113, %v269
    %271 = vmatmul.bf16.gmra.mxu0 %v152
    %v272 = vpop.f32.mrf.mxu0
    %v273 = vadd.f32 %v113, %v272
    %v274 = vpop.f32.mrf.mxu0
    %v275 = vadd.f32 %v113, %v274
    %276 = vmatmul.bf16.gmra.mxu0 %v155
    %v277 = vpop.f32.mrf.mxu0
    %v278 = vadd.f32 %v113, %v277
    %v279 = vpop.f32.mrf.mxu0
    %v280 = vadd.f32 %v113, %v279
    %281 = vdwg.mxu0
    %v314 = vunpack.c.l.b16 %v67
    %v315 = vunpack.c.h.b16 %v67
    %v316 = vunpack.c.l.b16 %v68
    %v317 = vunpack.c.h.b16 %v68
    %v318 = vunpack.c.l.b16 %v69
    %v319 = vunpack.c.h.b16 %v69
    %v320 = vunpack.c.l.b16 %v70
    %v321 = vunpack.c.h.b16 %v70
    %v322 = vunpack.c.l.b16 %v71
    %v323 = vunpack.c.h.b16 %v71
    %v324 = vunpack.c.l.b16 %v72
    %v325 = vunpack.c.h.b16 %v72
    %v326 = vunpack.c.l.b16 %v73
    %v327 = vunpack.c.h.b16 %v73
    %v328 = vunpack.c.l.b16 %v74
    %v329 = vunpack.c.h.b16 %v74
    %v330 = vunpack.c.l.b16 %v75
    %v331 = vunpack.c.h.b16 %v75
    %v332 = vunpack.c.l.b16 %v76
    %v333 = vunpack.c.h.b16 %v76
    %v334 = vunpack.c.l.b16 %v77
    %v335 = vunpack.c.h.b16 %v77
    %v336 = vunpack.c.l.b16 %v78
    %v337 = vunpack.c.h.b16 %v78
    %v338 = vunpack.c.l.b16 %v79
    %v339 = vunpack.c.h.b16 %v79
    %v340 = vunpack.c.l.b16 %v80
    %v341 = vunpack.c.h.b16 %v80
    %v342 = vunpack.c.l.b16 %v81
    %v343 = vunpack.c.h.b16 %v81
    %v344 = vunpack.c.l.b16 %v82
    %v345 = vunpack.c.h.b16 %v82
    %v346 = vunpack.c.l.b16 %v83
    %v347 = vunpack.c.h.b16 %v83
    %v348 = vunpack.c.l.b16 %v84
    %v349 = vunpack.c.h.b16 %v84
    %v350 = vunpack.c.l.b16 %v85
    %v351 = vunpack.c.h.b16 %v85
    %v352 = vunpack.c.l.b16 %v86
    %v353 = vunpack.c.h.b16 %v86
    %v354 = vunpack.c.l.b16 %v87
    %v355 = vunpack.c.h.b16 %v87
    %v356 = vunpack.c.l.b16 %v88
    %v357 = vunpack.c.h.b16 %v88
    %v358 = vunpack.c.l.b16 %v89
    %v359 = vunpack.c.h.b16 %v89
    %v360 = vunpack.c.l.b16 %v90
    %v361 = vunpack.c.h.b16 %v90
    %v362 = vunpack.c.l.b16 %v91
    %v363 = vunpack.c.h.b16 %v91
    %v364 = vunpack.c.l.b16 %v92
    %v365 = vunpack.c.h.b16 %v92
    %v366 = vunpack.c.l.b16 %v93
    %v367 = vunpack.c.h.b16 %v93
    %v368 = vunpack.c.l.b16 %v94
    %v369 = vunpack.c.h.b16 %v94
    %v370 = vunpack.c.l.b16 %v95
    %v371 = vunpack.c.h.b16 %v95
    %v372 = vunpack.c.l.b16 %v96
    %v373 = vunpack.c.h.b16 %v96
    %v374 = vunpack.c.l.b16 %v97
    %v375 = vunpack.c.h.b16 %v97
    %v376 = vunpack.c.l.b16 %v98
    %v377 = vunpack.c.h.b16 %v98
    %v378 = vpack.c.b16 %v318, %v314
    %v379 = vpack.c.b16 %v319, %v315
    %v380 = vpack.c.b16 %v320, %v316
    %v381 = vpack.c.b16 %v321, %v317
    %v382 = vpack.c.b16 %v326, %v322
    %v383 = vpack.c.b16 %v327, %v323
    %v384 = vpack.c.b16 %v328, %v324
    %v385 = vpack.c.b16 %v329, %v325
    %v386 = vpack.c.b16 %v334, %v330
    %v387 = vpack.c.b16 %v335, %v331
    %v388 = vpack.c.b16 %v336, %v332
    %v389 = vpack.c.b16 %v337, %v333
    %v390 = vpack.c.b16 %v342, %v338
    %v391 = vpack.c.b16 %v343, %v339
    %v392 = vpack.c.b16 %v344, %v340
    %v393 = vpack.c.b16 %v345, %v341
    %v394 = vpack.c.b16 %v350, %v346
    %v395 = vpack.c.b16 %v351, %v347
    %v396 = vpack.c.b16 %v352, %v348
    %v397 = vpack.c.b16 %v353, %v349
    %v398 = vpack.c.b16 %v358, %v354
    %v399 = vpack.c.b16 %v359, %v355
    %v400 = vpack.c.b16 %v360, %v356
    %v401 = vpack.c.b16 %v361, %v357
    %v402 = vpack.c.b16 %v366, %v362
    %v403 = vpack.c.b16 %v367, %v363
    %v404 = vpack.c.b16 %v368, %v364
    %v405 = vpack.c.b16 %v369, %v365
    %v406 = vpack.c.b16 %v374, %v370
    %v407 = vpack.c.b16 %v375, %v371
    %v408 = vpack.c.b16 %v376, %v372
    %v409 = vpack.c.b16 %v377, %v373
    %442 = vmatpush.bf16.msra.mxu0 %v406
    %443 = vmatpush.bf16.msra.mxu0 %v402
    %444 = vmatpush.bf16.msra.mxu0 %v398
    %445 = vmatpush.bf16.msra.mxu0 %v394
    %446 = vmatpush.bf16.msra.mxu0 %v390
    %447 = vmatpush.bf16.msra.mxu0 %v386
    %448 = vmatpush.bf16.msra.mxu0 %v382
    %449 = vmatpush.bf16.msra.mxu0 %v378
    %450 = vmatmul.bf16.gmra.mxu0 0
    %v451 = vpop.f32.mrf.mxu0
    %v452 = vadd.f32 0.0, %v451
    %v453 = vpop.f32.mrf.mxu0
    %454 = vdwg.mxu0
    %455 = vmatpush.bf16.msra.mxu0 %v407
    %456 = vmatpush.bf16.msra.mxu0 %v403
    %457 = vmatpush.bf16.msra.mxu0 %v399
    %458 = vmatpush.bf16.msra.mxu0 %v395
    %459 = vmatpush.bf16.msra.mxu0 %v391
    %460 = vmatpush.bf16.msra.mxu0 %v387
    %461 = vmatpush.bf16.msra.mxu0 %v383
    %462 = vmatpush.bf16.msra.mxu0 %v379
    %463 = vmatmul.bf16.gmra.mxu0 0
    %v464 = vpop.f32.mrf.mxu0
    %v465 = vadd.f32 0.0, %v464
    %v466 = vpop.f32.mrf.mxu0
    %467 = vdwg.mxu0
    %468 = vmatpush.bf16.msra.mxu0 %v408
    %469 = vmatpush.bf16.msra.mxu0 %v404
    %470 = vmatpush.bf16.msra.mxu0 %v400
    %471 = vmatpush.bf16.msra.mxu0 %v396
    %472 = vmatpush.bf16.msra.mxu0 %v392
    %473 = vmatpush.bf16.msra.mxu0 %v388
    %474 = vmatpush.bf16.msra.mxu0 %v384
    %475 = vmatpush.bf16.msra.mxu0 %v380
    %476 = vmatmul.bf16.gmra.mxu0 0
    %v477 = vpop.f32.mrf.mxu0
    %v478 = vadd.f32 0.0, %v477
    %v479 = vpop.f32.mrf.mxu0
    %480 = vdwg.mxu0
    %481 = vmatpush.bf16.msra.mxu0 %v409
    %482 = vmatpush.bf16.msra.mxu0 %v405
    %483 = vmatpush.bf16.msra.mxu0 %v401
    %484 = vmatpush.bf16.msra.mxu0 %v397
    %485 = vmatpush.bf16.msra.mxu0 %v393
    %486 = vmatpush.bf16.msra.mxu0 %v389
    %487 = vmatpush.bf16.msra.mxu0 %v385
    %488 = vmatpush.bf16.msra.mxu0 %v381
    %489 = vmatmul.bf16.gmra.mxu0 0
    %v490 = vpop.f32.mrf.mxu0
    %v491 = vadd.f32 0.0, %v490
    %v492 = vpop.f32.mrf.mxu0
    %493 = vdwg.mxu0
    %v494 = vadd.f32 %v176, %v452
    %v495 = vadd.f32 %v205, %v465
    %v496 = vadd.f32 %v234, %v478
    %v497 = vadd.f32 %v263, %v491
    %v498 = vxor.u32 %v494, 2147483648
    %v499 = vxor.u32 %v495, 2147483648
    %v500 = vxor.u32 %v496, 2147483648
    %v501 = vxor.u32 %v497, 2147483648
    %v502 = vmul.f32 %v498, 1.442695
    %v503 = vpow.pop %v502
    %v504 = vmul.f32 %v499, 1.442695
    %v505 = vpow.pop %v504
    %v506 = vmul.f32 %v500, 1.442695
    %v507 = vpow.pop %v506
    %v508 = vmul.f32 %v501, 1.442695
    %v509 = vpow.pop %v508
    %v510 = vadd.f32 %v503, 1.0
    %v511 = vadd.f32 %v505, 1.0
    %v512 = vadd.f32 %v507, 1.0
    %v513 = vadd.f32 %v509, 1.0
    %v514 = vrcp.pop %v510
    %v515 = vmul.f32 %v510, %v514
    %v516 = vsub.f32 1.0, %v515
    %v517 = vmul.f32 %v514, %v516
    %v518 = vadd.f32 %v514, %v517
    %vm519 = vweird.f32 %v510
    %vm520 = vweird.f32 %v514
    %vm521 = vmor %vm519, %vm520
    %v522 = vsel %vm521, %v514, %v518
    %v523 = vand.u32 2147483647, %v510
    %vm524 = vcmp.eq.f32.partialorder %v523, 8.507059e+37
    %v525 = vand.u32 %v510, 2147483648
    %v526 = vor.u32 1.1754944e-38, %v525
    %v527 = vsel %vm524, %v526, %v522
    %v528 = vmul.f32 1.0, %v527
    %v529 = vrcp.pop %v511
    %v530 = vmul.f32 %v511, %v529
    %v531 = vsub.f32 1.0, %v530
    %v532 = vmul.f32 %v529, %v531
    %v533 = vadd.f32 %v529, %v532
    %vm534 = vweird.f32 %v511
    %vm535 = vweird.f32 %v529
    %vm536 = vmor %vm534, %vm535
    %v537 = vsel %vm536, %v529, %v533
    %v538 = vand.u32 2147483647, %v511
    %vm539 = vcmp.eq.f32.partialorder %v538, 8.507059e+37
    %v540 = vand.u32 %v511, 2147483648
    %v541 = vor.u32 1.1754944e-38, %v540
    %v542 = vsel %vm539, %v541, %v537
    %v543 = vmul.f32 1.0, %v542
    %v544 = vrcp.pop %v512
    %v545 = vmul.f32 %v512, %v544
    %v546 = vsub.f32 1.0, %v545
    %v547 = vmul.f32 %v544, %v546
    %v548 = vadd.f32 %v544, %v547
    %vm549 = vweird.f32 %v512
    %vm550 = vweird.f32 %v544
    %vm551 = vmor %vm549, %vm550
    %v552 = vsel %vm551, %v544, %v548
    %v553 = vand.u32 2147483647, %v512
    %vm554 = vcmp.eq.f32.partialorder %v553, 8.507059e+37
    %v555 = vand.u32 %v512, 2147483648
    %v556 = vor.u32 1.1754944e-38, %v555
    %v557 = vsel %vm554, %v556, %v552
    %v558 = vmul.f32 1.0, %v557
    %v559 = vrcp.pop %v513
    %v560 = vmul.f32 %v513, %v559
    %v561 = vsub.f32 1.0, %v560
    %v562 = vmul.f32 %v559, %v561
    %v563 = vadd.f32 %v559, %v562
    %vm564 = vweird.f32 %v513
    %vm565 = vweird.f32 %v559
    %vm566 = vmor %vm564, %vm565
    %v567 = vsel %vm566, %v559, %v563
    %v568 = vand.u32 2147483647, %v513
    %vm569 = vcmp.eq.f32.partialorder %v568, 8.507059e+37
    %v570 = vand.u32 %v513, 2147483648
    %v571 = vor.u32 1.1754944e-38, %v570
    %v572 = vsel %vm569, %v571, %v567
    %v573 = vmul.f32 1.0, %v572
    %v574 = vmul.f32 %v558, 2.0
    %v575 = vsub.f32 %v574, 1.0
    %v576 = vmul.f32 %v543, 0.0
    %v577 = vmul.f32 %v528, %v575
    %v578 = vadd.f32 %v576, %v577
    %v579 = vtanh.pop %v578
    %v580 = vmul.f32 %v573, %v579
    %v581 = vpack.c.bf16 %v580, %v580
    %582 = vmatpush.bf16.msra.mxu0 %v406
    %583 = vmatpush.bf16.msra.mxu0 %v402
    %584 = vmatpush.bf16.msra.mxu0 %v398
    %585 = vmatpush.bf16.msra.mxu0 %v394
    %586 = vmatpush.bf16.msra.mxu0 %v390
    %587 = vmatpush.bf16.msra.mxu0 %v386
    %588 = vmatpush.bf16.msra.mxu0 %v382
    %589 = vmatpush.bf16.msra.mxu0 %v378
    %590 = vmatmul.bf16.gmra.mxu0 %v581
    %v591 = vpop.f32.mrf.mxu0
    %v592 = vadd.f32 0.0, %v591
    %v593 = vpop.f32.mrf.mxu0
    %594 = vdwg.mxu0
    %595 = vmatpush.bf16.msra.mxu0 %v407
    %596 = vmatpush.bf16.msra.mxu0 %v403
    %597 = vmatpush.bf16.msra.mxu0 %v399
    %598 = vmatpush.bf16.msra.mxu0 %v395
    %599 = vmatpush.bf16.msra.mxu0 %v391
    %600 = vmatpush.bf16.msra.mxu0 %v387
    %601 = vmatpush.bf16.msra.mxu0 %v383
    %602 = vmatpush.bf16.msra.mxu0 %v379
    %603 = vmatmul.bf16.gmra.mxu0 %v581
    %v604 = vpop.f32.mrf.mxu0
    %v605 = vadd.f32 0.0, %v604
    %v606 = vpop.f32.mrf.mxu0
    %607 = vdwg.mxu0
    %608 = vmatpush.bf16.msra.mxu0 %v408
    %609 = vmatpush.bf16.msra.mxu0 %v404
    %610 = vmatpush.bf16.msra.mxu0 %v400
    %611 = vmatpush.bf16.msra.mxu0 %v396
    %612 = vmatpush.bf16.msra.mxu0 %v392
    %613 = vmatpush.bf16.msra.mxu0 %v388
    %614 = vmatpush.bf16.msra.mxu0 %v384
    %615 = vmatpush.bf16.msra.mxu0 %v380
    %616 = vmatmul.bf16.gmra.mxu0 %v581
    %v617 = vpop.f32.mrf.mxu0
    %v618 = vadd.f32 0.0, %v617
    %v619 = vpop.f32.mrf.mxu0
    %620 = vdwg.mxu0
    %621 = vmatpush.bf16.msra.mxu0 %v409
    %622 = vmatpush.bf16.msra.mxu0 %v405
    %623 = vmatpush.bf16.msra.mxu0 %v401
    %624 = vmatpush.bf16.msra.mxu0 %v397
    %625 = vmatpush.bf16.msra.mxu0 %v393
    %626 = vmatpush.bf16.msra.mxu0 %v389
    %627 = vmatpush.bf16.msra.mxu0 %v385
    %628 = vmatpush.bf16.msra.mxu0 %v381
    %629 = vmatmul.bf16.gmra.mxu0 %v581
    %v630 = vpop.f32.mrf.mxu0
    %v631 = vadd.f32 0.0, %v630
    %v632 = vpop.f32.mrf.mxu0
    %633 = vdwg.mxu0
    %v634 = vadd.f32 %v178, %v592
    %v635 = vadd.f32 %v207, %v605
    %v636 = vadd.f32 %v236, %v618
    %v637 = vadd.f32 %v265, %v631
    %v638 = vxor.u32 %v634, 2147483648
    %v639 = vxor.u32 %v635, 2147483648
    %v640 = vxor.u32 %v636, 2147483648
    %v641 = vxor.u32 %v637, 2147483648
    %v642 = vmul.f32 %v638, 1.442695
    %v643 = vpow.pop %v642
    %v644 = vmul.f32 %v639, 1.442695
    %v645 = vpow.pop %v644
    %v646 = vmul.f32 %v640, 1.442695
    %v647 = vpow.pop %v646
    %v648 = vmul.f32 %v641, 1.442695
    %v649 = vpow.pop %v648
    %v650 = vadd.f32 %v643, 1.0
    %v651 = vadd.f32 %v645, 1.0
    %v652 = vadd.f32 %v647, 1.0
    %v653 = vadd.f32 %v649, 1.0
    %v654 = vrcp.pop %v650
    %v655 = vmul.f32 %v650, %v654
    %v656 = vsub.f32 1.0, %v655
    %v657 = vmul.f32 %v654, %v656
    %v658 = vadd.f32 %v654, %v657
    %vm659 = vweird.f32 %v650
    %vm660 = vweird.f32 %v654
    %vm661 = vmor %vm659, %vm660
    %v662 = vsel %vm661, %v654, %v658
    %v663 = vand.u32 2147483647, %v650
    %vm664 = vcmp.eq.f32.partialorder %v663, 8.507059e+37
    %v665 = vand.u32 %v650, 2147483648
    %v666 = vor.u32 1.1754944e-38, %v665
    %v667 = vsel %vm664, %v666, %v662
    %v668 = vmul.f32 1.0, %v667
    %v669 = vrcp.pop %v651
    %v670 = vmul.f32 %v651, %v669
    %v671 = vsub.f32 1.0, %v670
    %v672 = vmul.f32 %v669, %v671
    %v673 = vadd.f32 %v669, %v672
    %vm674 = vweird.f32 %v651
    %vm675 = vweird.f32 %v669
    %vm676 = vmor %vm674, %vm675
    %v677 = vsel %vm676, %v669, %v673
    %v678 = vand.u32 2147483647, %v651
    %vm679 = vcmp.eq.f32.partialorder %v678, 8.507059e+37
    %v680 = vand.u32 %v651, 2147483648
    %v681 = vor.u32 1.1754944e-38, %v680
    %v682 = vsel %vm679, %v681, %v677
    %v683 = vmul.f32 1.0, %v682
    %v684 = vrcp.pop %v652
    %v685 = vmul.f32 %v652, %v684
    %v686 = vsub.f32 1.0, %v685
    %v687 = vmul.f32 %v684, %v686
    %v688 = vadd.f32 %v684, %v687
    %vm689 = vweird.f32 %v652
    %vm690 = vweird.f32 %v684
    %vm691 = vmor %vm689, %vm690
    %v692 = vsel %vm691, %v684, %v688
    %v693 = vand.u32 2147483647, %v652
    %vm694 = vcmp.eq.f32.partialorder %v693, 8.507059e+37
    %v695 = vand.u32 %v652, 2147483648
    %v696 = vor.u32 1.1754944e-38, %v695
    %v697 = vsel %vm694, %v696, %v692
    %v698 = vmul.f32 1.0, %v697
    %v699 = vrcp.pop %v653
    %v700 = vmul.f32 %v653, %v699
    %v701 = vsub.f32 1.0, %v700
    %v702 = vmul.f32 %v699, %v701
    %v703 = vadd.f32 %v699, %v702
    %vm704 = vweird.f32 %v653
    %vm705 = vweird.f32 %v699
    %vm706 = vmor %vm704, %vm705
    %v707 = vsel %vm706, %v699, %v703
    %v708 = vand.u32 2147483647, %v653
    %vm709 = vcmp.eq.f32.partialorder %v708, 8.507059e+37
    %v710 = vand.u32 %v653, 2147483648
    %v711 = vor.u32 1.1754944e-38, %v710
    %v712 = vsel %vm709, %v711, %v707
    %v713 = vmul.f32 1.0, %v712
    %v714 = vmul.f32 %v698, 2.0
    %v715 = vsub.f32 %v714, 1.0
    %v716 = vmul.f32 %v683, %v578
    %v717 = vmul.f32 %v668, %v715
    %v718 = vadd.f32 %v716, %v717
    %v719 = vtanh.pop %v718
    %v720 = vmul.f32 %v713, %v719
    %v721 = vpack.c.bf16 %v720, %v720
    %722 = vmatpush.bf16.msra.mxu0 %v406
    %723 = vmatpush.bf16.msra.mxu0 %v402
    %724 = vmatpush.bf16.msra.mxu0 %v398
    %725 = vmatpush.bf16.msra.mxu0 %v394
    %726 = vmatpush.bf16.msra.mxu0 %v390
    %727 = vmatpush.bf16.msra.mxu0 %v386
    %728 = vmatpush.bf16.msra.mxu0 %v382
    %729 = vmatpush.bf16.msra.mxu0 %v378
    %730 = vmatmul.bf16.gmra.mxu0 %v721
    %v731 = vpop.f32.mrf.mxu0
    %v732 = vadd.f32 0.0, %v731
    %v733 = vpop.f32.mrf.mxu0
    %734 = vdwg.mxu0
    %735 = vmatpush.bf16.msra.mxu0 %v407
    %736 = vmatpush.bf16.msra.mxu0 %v403
    %737 = vmatpush.bf16.msra.mxu0 %v399
    %738 = vmatpush.bf16.msra.mxu0 %v395
    %739 = vmatpush.bf16.msra.mxu0 %v391
    %740 = vmatpush.bf16.msra.mxu0 %v387
    %741 = vmatpush.bf16.msra.mxu0 %v383
    %742 = vmatpush.bf16.msra.mxu0 %v379
    %743 = vmatmul.bf16.gmra.mxu0 %v721
    %v744 = vpop.f32.mrf.mxu0
    %v745 = vadd.f32 0.0, %v744
    %v746 = vpop.f32.mrf.mxu0
    %747 = vdwg.mxu0
    %748 = vmatpush.bf16.msra.mxu0 %v408
    %749 = vmatpush.bf16.msra.mxu0 %v404
    %750 = vmatpush.bf16.msra.mxu0 %v400
    %751 = vmatpush.bf16.msra.mxu0 %v396
    %752 = vmatpush.bf16.msra.mxu0 %v392
    %753 = vmatpush.bf16.msra.mxu0 %v388
    %754 = vmatpush.bf16.msra.mxu0 %v384
    %755 = vmatpush.bf16.msra.mxu0 %v380
    %756 = vmatmul.bf16.gmra.mxu0 %v721
    %v757 = vpop.f32.mrf.mxu0
    %v758 = vadd.f32 0.0, %v757
    %v759 = vpop.f32.mrf.mxu0
    %760 = vdwg.mxu0
    %761 = vmatpush.bf16.msra.mxu0 %v409
    %762 = vmatpush.bf16.msra.mxu0 %v405
    %763 = vmatpush.bf16.msra.mxu0 %v401
    %764 = vmatpush.bf16.msra.mxu0 %v397
    %765 = vmatpush.bf16.msra.mxu0 %v393
    %766 = vmatpush.bf16.msra.mxu0 %v389
    %767 = vmatpush.bf16.msra.mxu0 %v385
    %768 = vmatpush.bf16.msra.mxu0 %v381
    %769 = vmatmul.bf16.gmra.mxu0 %v721
    %v770 = vpop.f32.mrf.mxu0
    %v771 = vadd.f32 0.0, %v770
    %v772 = vpop.f32.mrf.mxu0
    %773 = vdwg.mxu0
    %v774 = vadd.f32 %v181, %v732
    %v775 = vadd.f32 %v210, %v745
    %v776 = vadd.f32 %v239, %v758
    %v777 = vadd.f32 %v268, %v771
    %v778 = vxor.u32 %v774, 2147483648
    %v779 = vxor.u32 %v775, 2147483648
    %v780 = vxor.u32 %v776, 2147483648
    %v781 = vxor.u32 %v777, 2147483648
    %v782 = vmul.f32 %v778, 1.442695
    %v783 = vpow.pop %v782
    %v784 = vmul.f32 %v779, 1.442695
    %v785 = vpow.pop %v784
    %v786 = vmul.f32 %v780, 1.442695
    %v787 = vpow.pop %v786
    %v788 = vmul.f32 %v781, 1.442695
    %v789 = vpow.pop %v788
    %v790 = vadd.f32 %v783, 1.0
    %v791 = vadd.f32 %v785, 1.0
    %v792 = vadd.f32 %v787, 1.0
    %v793 = vadd.f32 %v789, 1.0
    %v794 = vrcp.pop %v790
    %v795 = vmul.f32 %v790, %v794
    %v796 = vsub.f32 1.0, %v795
    %v797 = vmul.f32 %v794, %v796
    %v798 = vadd.f32 %v794, %v797
    %vm799 = vweird.f32 %v790
    %vm800 = vweird.f32 %v794
    %vm801 = vmor %vm799, %vm800
    %v802 = vsel %vm801, %v794, %v798
    %v803 = vand.u32 2147483647, %v790
    %vm804 = vcmp.eq.f32.partialorder %v803, 8.507059e+37
    %v805 = vand.u32 %v790, 2147483648
    %v806 = vor.u32 1.1754944e-38, %v805
    %v807 = vsel %vm804, %v806, %v802
    %v808 = vmul.f32 1.0, %v807
    %v809 = vrcp.pop %v791
    %v810 = vmul.f32 %v791, %v809
    %v811 = vsub.f32 1.0, %v810
    %v812 = vmul.f32 %v809, %v811
    %v813 = vadd.f32 %v809, %v812
    %vm814 = vweird.f32 %v791
    %vm815 = vweird.f32 %v809
    %vm816 = vmor %vm814, %vm815
    %v817 = vsel %vm816, %v809, %v813
    %v818 = vand.u32 2147483647, %v791
    %vm819 = vcmp.eq.f32.partialorder %v818, 8.507059e+37
    %v820 = vand.u32 %v791, 2147483648
    %v821 = vor.u32 1.1754944e-38, %v820
    %v822 = vsel %vm819, %v821, %v817
    %v823 = vmul.f32 1.0, %v822
    %v824 = vrcp.pop %v792
    %v825 = vmul.f32 %v792, %v824
    %v826 = vsub.f32 1.0, %v825
    %v827 = vmul.f32 %v824, %v826
    %v828 = vadd.f32 %v824, %v827
    %vm829 = vweird.f32 %v792
    %vm830 = vweird.f32 %v824
    %vm831 = vmor %vm829, %vm830
    %v832 = vsel %vm831, %v824, %v828
    %v833 = vand.u32 2147483647, %v792
    %vm834 = vcmp.eq.f32.partialorder %v833, 8.507059e+37
    %v835 = vand.u32 %v792, 2147483648
    %v836 = vor.u32 1.1754944e-38, %v835
    %v837 = vsel %vm834, %v836, %v832
    %v838 = vmul.f32 1.0, %v837
    %v839 = vrcp.pop %v793
    %v840 = vmul.f32 %v793, %v839
    %v841 = vsub.f32 1.0, %v840
    %v842 = vmul.f32 %v839, %v841
    %v843 = vadd.f32 %v839, %v842
    %vm844 = vweird.f32 %v793
    %vm845 = vweird.f32 %v839
    %vm846 = vmor %vm844, %vm845
    %v847 = vsel %vm846, %v839, %v843
    %v848 = vand.u32 2147483647, %v793
    %vm849 = vcmp.eq.f32.partialorder %v848, 8.507059e+37
    %v850 = vand.u32 %v793, 2147483648
    %v851 = vor.u32 1.1754944e-38, %v850
    %v852 = vsel %vm849, %v851, %v847
    %v853 = vmul.f32 1.0, %v852
    %v854 = vmul.f32 %v838, 2.0
    %v855 = vsub.f32 %v854, 1.0
    %v856 = vmul.f32 %v823, %v718
    %v857 = vmul.f32 %v808, %v855
    %v858 = vadd.f32 %v856, %v857
    %v859 = vtanh.pop %v858
    %v860 = vmul.f32 %v853, %v859
    %v861 = vpack.c.bf16 %v860, %v860
    %862 = vmatpush.bf16.msra.mxu0 %v406
    %863 = vmatpush.bf16.msra.mxu0 %v402
    %864 = vmatpush.bf16.msra.mxu0 %v398
    %865 = vmatpush.bf16.msra.mxu0 %v394
    %866 = vmatpush.bf16.msra.mxu0 %v390
    %867 = vmatpush.bf16.msra.mxu0 %v386
    %868 = vmatpush.bf16.msra.mxu0 %v382
    %869 = vmatpush.bf16.msra.mxu0 %v378
    %870 = vmatmul.bf16.gmra.mxu0 %v861
    %v871 = vpop.f32.mrf.mxu0
    %v872 = vadd.f32 0.0, %v871
    %v873 = vpop.f32.mrf.mxu0
    %874 = vdwg.mxu0
    %875 = vmatpush.bf16.msra.mxu0 %v407
    %876 = vmatpush.bf16.msra.mxu0 %v403
    %877 = vmatpush.bf16.msra.mxu0 %v399
    %878 = vmatpush.bf16.msra.mxu0 %v395
    %879 = vmatpush.bf16.msra.mxu0 %v391
    %880 = vmatpush.bf16.msra.mxu0 %v387
    %881 = vmatpush.bf16.msra.mxu0 %v383
    %882 = vmatpush.bf16.msra.mxu0 %v379
    %883 = vmatmul.bf16.gmra.mxu0 %v861
    %v884 = vpop.f32.mrf.mxu0
    %v885 = vadd.f32 0.0, %v884
    %v886 = vpop.f32.mrf.mxu0
    %887 = vdwg.mxu0
    %888 = vmatpush.bf16.msra.mxu0 %v408
    %889 = vmatpush.bf16.msra.mxu0 %v404
    %890 = vmatpush.bf16.msra.mxu0 %v400
    %891 = vmatpush.bf16.msra.mxu0 %v396
    %892 = vmatpush.bf16.msra.mxu0 %v392
    %893 = vmatpush.bf16.msra.mxu0 %v388
    %894 = vmatpush.bf16.msra.mxu0 %v384
    %895 = vmatpush.bf16.msra.mxu0 %v380
    %896 = vmatmul.bf16.gmra.mxu0 %v861
    %v897 = vpop.f32.mrf.mxu0
    %v898 = vadd.f32 0.0, %v897
    %v899 = vpop.f32.mrf.mxu0
    %900 = vdwg.mxu0
    %901 = vmatpush.bf16.msra.mxu0 %v409
    %902 = vmatpush.bf16.msra.mxu0 %v405
    %903 = vmatpush.bf16.msra.mxu0 %v401
    %904 = vmatpush.bf16.msra.mxu0 %v397
    %905 = vmatpush.bf16.msra.mxu0 %v393
    %906 = vmatpush.bf16.msra.mxu0 %v389
    %907 = vmatpush.bf16.msra.mxu0 %v385
    %908 = vmatpush.bf16.msra.mxu0 %v381
    %909 = vmatmul.bf16.gmra.mxu0 %v861
    %v910 = vpop.f32.mrf.mxu0
    %v911 = vadd.f32 0.0, %v910
    %v912 = vpop.f32.mrf.mxu0
    %913 = vdwg.mxu0
    %v914 = vadd.f32 %v183, %v872
    %v915 = vadd.f32 %v212, %v885
    %v916 = vadd.f32 %v241, %v898
    %v917 = vadd.f32 %v270, %v911
    %v918 = vxor.u32 %v914, 2147483648
    %v919 = vxor.u32 %v915, 2147483648
    %v920 = vxor.u32 %v916, 2147483648
    %v921 = vxor.u32 %v917, 2147483648
    %v922 = vmul.f32 %v918, 1.442695
    %v923 = vpow.pop %v922
    %v924 = vmul.f32 %v919, 1.442695
    %v925 = vpow.pop %v924
    %v926 = vmul.f32 %v920, 1.442695
    %v927 = vpow.pop %v926
    %v928 = vmul.f32 %v921, 1.442695
    %v929 = vpow.pop %v928
    %v930 = vadd.f32 %v923, 1.0
    %v931 = vadd.f32 %v925, 1.0
    %v932 = vadd.f32 %v927, 1.0
    %v933 = vadd.f32 %v929, 1.0
    %v934 = vrcp.pop %v930
    %v935 = vmul.f32 %v930, %v934
    %v936 = vsub.f32 1.0, %v935
    %v937 = vmul.f32 %v934, %v936
    %v938 = vadd.f32 %v934, %v937
    %vm939 = vweird.f32 %v930
    %vm940 = vweird.f32 %v934
    %vm941 = vmor %vm939, %vm940
    %v942 = vsel %vm941, %v934, %v938
    %v943 = vand.u32 2147483647, %v930
    %vm944 = vcmp.eq.f32.partialorder %v943, 8.507059e+37
    %v945 = vand.u32 %v930, 2147483648
    %v946 = vor.u32 1.1754944e-38, %v945
    %v947 = vsel %vm944, %v946, %v942
    %v948 = vmul.f32 1.0, %v947
    %v949 = vrcp.pop %v931
    %v950 = vmul.f32 %v931, %v949
    %v951 = vsub.f32 1.0, %v950
    %v952 = vmul.f32 %v949, %v951
    %v953 = vadd.f32 %v949, %v952
    %vm954 = vweird.f32 %v931
    %vm955 = vweird.f32 %v949
    %vm956 = vmor %vm954, %vm955
    %v957 = vsel %vm956, %v949, %v953
    %v958 = vand.u32 2147483647, %v931
    %vm959 = vcmp.eq.f32.partialorder %v958, 8.507059e+37
    %v960 = vand.u32 %v931, 2147483648
    %v961 = vor.u32 1.1754944e-38, %v960
    %v962 = vsel %vm959, %v961, %v957
    %v963 = vmul.f32 1.0, %v962
    %v964 = vrcp.pop %v932
    %v965 = vmul.f32 %v932, %v964
    %v966 = vsub.f32 1.0, %v965
    %v967 = vmul.f32 %v964, %v966
    %v968 = vadd.f32 %v964, %v967
    %vm969 = vweird.f32 %v932
    %vm970 = vweird.f32 %v964
    %vm971 = vmor %vm969, %vm970
    %v972 = vsel %vm971, %v964, %v968
    %v973 = vand.u32 2147483647, %v932
    %vm974 = vcmp.eq.f32.partialorder %v973, 8.507059e+37
    %v975 = vand.u32 %v932, 2147483648
    %v976 = vor.u32 1.1754944e-38, %v975
    %v977 = vsel %vm974, %v976, %v972
    %v978 = vmul.f32 1.0, %v977
    %v979 = vrcp.pop %v933
    %v980 = vmul.f32 %v933, %v979
    %v981 = vsub.f32 1.0, %v980
    %v982 = vmul.f32 %v979, %v981
    %v983 = vadd.f32 %v979, %v982
    %vm984 = vweird.f32 %v933
    %vm985 = vweird.f32 %v979
    %vm986 = vmor %vm984, %vm985
    %v987 = vsel %vm986, %v979, %v983
    %v988 = vand.u32 2147483647, %v933
    %vm989 = vcmp.eq.f32.partialorder %v988, 8.507059e+37
    %v990 = vand.u32 %v933, 2147483648
    %v991 = vor.u32 1.1754944e-38, %v990
    %v992 = vsel %vm989, %v991, %v987
    %v993 = vmul.f32 1.0, %v992
    %v994 = vmul.f32 %v978, 2.0
    %v995 = vsub.f32 %v994, 1.0
    %v996 = vmul.f32 %v963, %v858
    %v997 = vmul.f32 %v948, %v995
    %v998 = vadd.f32 %v996, %v997
    %v999 = vtanh.pop %v998
    %v1000 = vmul.f32 %v993, %v999
    %v1001 = vpack.c.bf16 %v1000, %v1000
    %1002 = vmatpush.bf16.msra.mxu0 %v406
    %1003 = vmatpush.bf16.msra.mxu0 %v402
    %1004 = vmatpush.bf16.msra.mxu0 %v398
    %1005 = vmatpush.bf16.msra.mxu0 %v394
    %1006 = vmatpush.bf16.msra.mxu0 %v390
    %1007 = vmatpush.bf16.msra.mxu0 %v386
    %1008 = vmatpush.bf16.msra.mxu0 %v382
    %1009 = vmatpush.bf16.msra.mxu0 %v378
    %1010 = vmatmul.bf16.gmra.mxu0 %v1001
    %v1011 = vpop.f32.mrf.mxu0
    %v1012 = vadd.f32 0.0, %v1011
    %v1013 = vpop.f32.mrf.mxu0
    %1014 = vdwg.mxu0
    %1015 = vmatpush.bf16.msra.mxu0 %v407
    %1016 = vmatpush.bf16.msra.mxu0 %v403
    %1017 = vmatpush.bf16.msra.mxu0 %v399
    %1018 = vmatpush.bf16.msra.mxu0 %v395
    %1019 = vmatpush.bf16.msra.mxu0 %v391
    %1020 = vmatpush.bf16.msra.mxu0 %v387
    %1021 = vmatpush.bf16.msra.mxu0 %v383
    %1022 = vmatpush.bf16.msra.mxu0 %v379
    %1023 = vmatmul.bf16.gmra.mxu0 %v1001
    %v1024 = vpop.f32.mrf.mxu0
    %v1025 = vadd.f32 0.0, %v1024
    %v1026 = vpop.f32.mrf.mxu0
    %1027 = vdwg.mxu0
    %1028 = vmatpush.bf16.msra.mxu0 %v408
    %1029 = vmatpush.bf16.msra.mxu0 %v404
    %1030 = vmatpush.bf16.msra.mxu0 %v400
    %1031 = vmatpush.bf16.msra.mxu0 %v396
    %1032 = vmatpush.bf16.msra.mxu0 %v392
    %1033 = vmatpush.bf16.msra.mxu0 %v388
    %1034 = vmatpush.bf16.msra.mxu0 %v384
    %1035 = vmatpush.bf16.msra.mxu0 %v380
    %1036 = vmatmul.bf16.gmra.mxu0 %v1001
    %v1037 = vpop.f32.mrf.mxu0
    %v1038 = vadd.f32 0.0, %v1037
    %v1039 = vpop.f32.mrf.mxu0
    %1040 = vdwg.mxu0
    %1041 = vmatpush.bf16.msra.mxu0 %v409
    %1042 = vmatpush.bf16.msra.mxu0 %v405
    %1043 = vmatpush.bf16.msra.mxu0 %v401
    %1044 = vmatpush.bf16.msra.mxu0 %v397
    %1045 = vmatpush.bf16.msra.mxu0 %v393
    %1046 = vmatpush.bf16.msra.mxu0 %v389
    %1047 = vmatpush.bf16.msra.mxu0 %v385
    %1048 = vmatpush.bf16.msra.mxu0 %v381
    %1049 = vmatmul.bf16.gmra.mxu0 %v1001
    %v1050 = vpop.f32.mrf.mxu0
    %v1051 = vadd.f32 0.0, %v1050
    %v1052 = vpop.f32.mrf.mxu0
    %1053 = vdwg.mxu0
    %v1054 = vadd.f32 %v186, %v1012
    %v1055 = vadd.f32 %v215, %v1025
    %v1056 = vadd.f32 %v244, %v1038
    %v1057 = vadd.f32 %v273, %v1051
    %v1058 = vxor.u32 %v1054, 2147483648
    %v1059 = vxor.u32 %v1055, 2147483648
    %v1060 = vxor.u32 %v1056, 2147483648
    %v1061 = vxor.u32 %v1057, 2147483648
    %v1062 = vmul.f32 %v1058, 1.442695
    %v1063 = vpow.pop %v1062
    %v1064 = vmul.f32 %v1059, 1.442695
    %v1065 = vpow.pop %v1064
    %v1066 = vmul.f32 %v1060, 1.442695
    %v1067 = vpow.pop %v1066
    %v1068 = vmul.f32 %v1061, 1.442695
    %v1069 = vpow.pop %v1068
    %v1070 = vadd.f32 %v1063, 1.0
    %v1071 = vadd.f32 %v1065, 1.0
    %v1072 = vadd.f32 %v1067, 1.0
    %v1073 = vadd.f32 %v1069, 1.0
    %v1074 = vrcp.pop %v1070
    %v1075 = vmul.f32 %v1070, %v1074
    %v1076 = vsub.f32 1.0, %v1075
    %v1077 = vmul.f32 %v1074, %v1076
    %v1078 = vadd.f32 %v1074, %v1077
    %vm1079 = vweird.f32 %v1070
    %vm1080 = vweird.f32 %v1074
    %vm1081 = vmor %vm1079, %vm1080
    %v1082 = vsel %vm1081, %v1074, %v1078
    %v1083 = vand.u32 2147483647, %v1070
    %vm1084 = vcmp.eq.f32.partialorder %v1083, 8.507059e+37
    %v1085 = vand.u32 %v1070, 2147483648
    %v1086 = vor.u32 1.1754944e-38, %v1085
    %v1087 = vsel %vm1084, %v1086, %v1082
    %v1088 = vmul.f32 1.0, %v1087
    %v1089 = vrcp.pop %v1071
    %v1090 = vmul.f32 %v1071, %v1089
    %v1091 = vsub.f32 1.0, %v1090
    %v1092 = vmul.f32 %v1089, %v1091
    %v1093 = vadd.f32 %v1089, %v1092
    %vm1094 = vweird.f32 %v1071
    %vm1095 = vweird.f32 %v1089
    %vm1096 = vmor %vm1094, %vm1095
    %v1097 = vsel %vm1096, %v1089, %v1093
    %v1098 = vand.u32 2147483647, %v1071
    %vm1099 = vcmp.eq.f32.partialorder %v1098, 8.507059e+37
    %v1100 = vand.u32 %v1071, 2147483648
    %v1101 = vor.u32 1.1754944e-38, %v1100
    %v1102 = vsel %vm1099, %v1101, %v1097
    %v1103 = vmul.f32 1.0, %v1102
    %v1104 = vrcp.pop %v1072
    %v1105 = vmul.f32 %v1072, %v1104
    %v1106 = vsub.f32 1.0, %v1105
    %v1107 = vmul.f32 %v1104, %v1106
    %v1108 = vadd.f32 %v1104, %v1107
    %vm1109 = vweird.f32 %v1072
    %vm1110 = vweird.f32 %v1104
    %vm1111 = vmor %vm1109, %vm1110
    %v1112 = vsel %vm1111, %v1104, %v1108
    %v1113 = vand.u32 2147483647, %v1072
    %vm1114 = vcmp.eq.f32.partialorder %v1113, 8.507059e+37
    %v1115 = vand.u32 %v1072, 2147483648
    %v1116 = vor.u32 1.1754944e-38, %v1115
    %v1117 = vsel %vm1114, %v1116, %v1112
    %v1118 = vmul.f32 1.0, %v1117
    %v1119 = vrcp.pop %v1073
    %v1120 = vmul.f32 %v1073, %v1119
    %v1121 = vsub.f32 1.0, %v1120
    %v1122 = vmul.f32 %v1119, %v1121
    %v1123 = vadd.f32 %v1119, %v1122
    %vm1124 = vweird.f32 %v1073
    %vm1125 = vweird.f32 %v1119
    %vm1126 = vmor %vm1124, %vm1125
    %v1127 = vsel %vm1126, %v1119, %v1123
    %v1128 = vand.u32 2147483647, %v1073
    %vm1129 = vcmp.eq.f32.partialorder %v1128, 8.507059e+37
    %v1130 = vand.u32 %v1073, 2147483648
    %v1131 = vor.u32 1.1754944e-38, %v1130
    %v1132 = vsel %vm1129, %v1131, %v1127
    %v1133 = vmul.f32 1.0, %v1132
    %v1134 = vmul.f32 %v1118, 2.0
    %v1135 = vsub.f32 %v1134, 1.0
    %v1136 = vmul.f32 %v1103, %v998
    %v1137 = vmul.f32 %v1088, %v1135
    %v1138 = vadd.f32 %v1136, %v1137
    %v1139 = vtanh.pop %v1138
    %v1140 = vmul.f32 %v1133, %v1139
    %v1141 = vpack.c.bf16 %v1140, %v1140
    %1142 = vmatpush.bf16.msra.mxu0 %v406
    %1143 = vmatpush.bf16.msra.mxu0 %v402
    %1144 = vmatpush.bf16.msra.mxu0 %v398
    %1145 = vmatpush.bf16.msra.mxu0 %v394
    %1146 = vmatpush.bf16.msra.mxu0 %v390
    %1147 = vmatpush.bf16.msra.mxu0 %v386
    %1148 = vmatpush.bf16.msra.mxu0 %v382
    %1149 = vmatpush.bf16.msra.mxu0 %v378
    %1150 = vmatmul.bf16.gmra.mxu0 %v1141
    %v1151 = vpop.f32.mrf.mxu0
    %v1152 = vadd.f32 0.0, %v1151
    %v1153 = vpop.f32.mrf.mxu0
    %1154 = vdwg.mxu0
    %1155 = vmatpush.bf16.msra.mxu0 %v407
    %1156 = vmatpush.bf16.msra.mxu0 %v403
    %1157 = vmatpush.bf16.msra.mxu0 %v399
    %1158 = vmatpush.bf16.msra.mxu0 %v395
    %1159 = vmatpush.bf16.msra.mxu0 %v391
    %1160 = vmatpush.bf16.msra.mxu0 %v387
    %1161 = vmatpush.bf16.msra.mxu0 %v383
    %1162 = vmatpush.bf16.msra.mxu0 %v379
    %1163 = vmatmul.bf16.gmra.mxu0 %v1141
    %v1164 = vpop.f32.mrf.mxu0
    %v1165 = vadd.f32 0.0, %v1164
    %v1166 = vpop.f32.mrf.mxu0
    %1167 = vdwg.mxu0
    %1168 = vmatpush.bf16.msra.mxu0 %v408
    %1169 = vmatpush.bf16.msra.mxu0 %v404
    %1170 = vmatpush.bf16.msra.mxu0 %v400
    %1171 = vmatpush.bf16.msra.mxu0 %v396
    %1172 = vmatpush.bf16.msra.mxu0 %v392
    %1173 = vmatpush.bf16.msra.mxu0 %v388
    %1174 = vmatpush.bf16.msra.mxu0 %v384
    %1175 = vmatpush.bf16.msra.mxu0 %v380
    %1176 = vmatmul.bf16.gmra.mxu0 %v1141
    %v1177 = vpop.f32.mrf.mxu0
    %v1178 = vadd.f32 0.0, %v1177
    %v1179 = vpop.f32.mrf.mxu0
    %1180 = vdwg.mxu0
    %1181 = vmatpush.bf16.msra.mxu0 %v409
    %1182 = vmatpush.bf16.msra.mxu0 %v405
    %1183 = vmatpush.bf16.msra.mxu0 %v401
    %1184 = vmatpush.bf16.msra.mxu0 %v397
    %1185 = vmatpush.bf16.msra.mxu0 %v393
    %1186 = vmatpush.bf16.msra.mxu0 %v389
    %1187 = vmatpush.bf16.msra.mxu0 %v385
    %1188 = vmatpush.bf16.msra.mxu0 %v381
    %1189 = vmatmul.bf16.gmra.mxu0 %v1141
    %v1190 = vpop.f32.mrf.mxu0
    %v1191 = vadd.f32 0.0, %v1190
    %v1192 = vpop.f32.mrf.mxu0
    %1193 = vdwg.mxu0
    %v1194 = vadd.f32 %v188, %v1152
    %v1195 = vadd.f32 %v217, %v1165
    %v1196 = vadd.f32 %v246, %v1178
    %v1197 = vadd.f32 %v275, %v1191
    %v1198 = vxor.u32 %v1194, 2147483648
    %v1199 = vxor.u32 %v1195, 2147483648
    %v1200 = vxor.u32 %v1196, 2147483648
    %v1201 = vxor.u32 %v1197, 2147483648
    %v1202 = vmul.f32 %v1198, 1.442695
    %v1203 = vpow.pop %v1202
    %v1204 = vmul.f32 %v1199, 1.442695
    %v1205 = vpow.pop %v1204
    %v1206 = vmul.f32 %v1200, 1.442695
    %v1207 = vpow.pop %v1206
    %v1208 = vmul.f32 %v1201, 1.442695
    %v1209 = vpow.pop %v1208
    %v1210 = vadd.f32 %v1203, 1.0
    %v1211 = vadd.f32 %v1205, 1.0
    %v1212 = vadd.f32 %v1207, 1.0
    %v1213 = vadd.f32 %v1209, 1.0
    %v1214 = vrcp.pop %v1210
    %v1215 = vmul.f32 %v1210, %v1214
    %v1216 = vsub.f32 1.0, %v1215
    %v1217 = vmul.f32 %v1214, %v1216
    %v1218 = vadd.f32 %v1214, %v1217
    %vm1219 = vweird.f32 %v1210
    %vm1220 = vweird.f32 %v1214
    %vm1221 = vmor %vm1219, %vm1220
    %v1222 = vsel %vm1221, %v1214, %v1218
    %v1223 = vand.u32 2147483647, %v1210
    %vm1224 = vcmp.eq.f32.partialorder %v1223, 8.507059e+37
    %v1225 = vand.u32 %v1210, 2147483648
    %v1226 = vor.u32 1.1754944e-38, %v1225
    %v1227 = vsel %vm1224, %v1226, %v1222
    %v1228 = vmul.f32 1.0, %v1227
    %v1229 = vrcp.pop %v1211
    %v1230 = vmul.f32 %v1211, %v1229
    %v1231 = vsub.f32 1.0, %v1230
    %v1232 = vmul.f32 %v1229, %v1231
    %v1233 = vadd.f32 %v1229, %v1232
    %vm1234 = vweird.f32 %v1211
    %vm1235 = vweird.f32 %v1229
    %vm1236 = vmor %vm1234, %vm1235
    %v1237 = vsel %vm1236, %v1229, %v1233
    %v1238 = vand.u32 2147483647, %v1211
    %vm1239 = vcmp.eq.f32.partialorder %v1238, 8.507059e+37
    %v1240 = vand.u32 %v1211, 2147483648
    %v1241 = vor.u32 1.1754944e-38, %v1240
    %v1242 = vsel %vm1239, %v1241, %v1237
    %v1243 = vmul.f32 1.0, %v1242
    %v1244 = vrcp.pop %v1212
    %v1245 = vmul.f32 %v1212, %v1244
    %v1246 = vsub.f32 1.0, %v1245
    %v1247 = vmul.f32 %v1244, %v1246
    %v1248 = vadd.f32 %v1244, %v1247
    %vm1249 = vweird.f32 %v1212
    %vm1250 = vweird.f32 %v1244
    %vm1251 = vmor %vm1249, %vm1250
    %v1252 = vsel %vm1251, %v1244, %v1248
    %v1253 = vand.u32 2147483647, %v1212
    %vm1254 = vcmp.eq.f32.partialorder %v1253, 8.507059e+37
    %v1255 = vand.u32 %v1212, 2147483648
    %v1256 = vor.u32 1.1754944e-38, %v1255
    %v1257 = vsel %vm1254, %v1256, %v1252
    %v1258 = vmul.f32 1.0, %v1257
    %v1259 = vrcp.pop %v1213
    %v1260 = vmul.f32 %v1213, %v1259
    %v1261 = vsub.f32 1.0, %v1260
    %v1262 = vmul.f32 %v1259, %v1261
    %v1263 = vadd.f32 %v1259, %v1262
    %vm1264 = vweird.f32 %v1213
    %vm1265 = vweird.f32 %v1259
    %vm1266 = vmor %vm1264, %vm1265
    %v1267 = vsel %vm1266, %v1259, %v1263
    %v1268 = vand.u32 2147483647, %v1213
    %vm1269 = vcmp.eq.f32.partialorder %v1268, 8.507059e+37
    %v1270 = vand.u32 %v1213, 2147483648
    %v1271 = vor.u32 1.1754944e-38, %v1270
    %v1272 = vsel %vm1269, %v1271, %v1267
    %v1273 = vmul.f32 1.0, %v1272
    %v1274 = vmul.f32 %v1258, 2.0
    %v1275 = vsub.f32 %v1274, 1.0
    %v1276 = vmul.f32 %v1243, %v1138
    %v1277 = vmul.f32 %v1228, %v1275
    %v1278 = vadd.f32 %v1276, %v1277
    %v1279 = vtanh.pop %v1278
    %v1280 = vmul.f32 %v1273, %v1279
    %v1281 = vpack.c.bf16 %v1280, %v1280
    %1282 = vmatpush.bf16.msra.mxu0 %v406
    %1283 = vmatpush.bf16.msra.mxu0 %v402
    %1284 = vmatpush.bf16.msra.mxu0 %v398
    %1285 = vmatpush.bf16.msra.mxu0 %v394
    %1286 = vmatpush.bf16.msra.mxu0 %v390
    %1287 = vmatpush.bf16.msra.mxu0 %v386
    %1288 = vmatpush.bf16.msra.mxu0 %v382
    %1289 = vmatpush.bf16.msra.mxu0 %v378
    %1290 = vmatmul.bf16.gmra.mxu0 %v1281
    %v1291 = vpop.f32.mrf.mxu0
    %v1292 = vadd.f32 0.0, %v1291
    %v1293 = vpop.f32.mrf.mxu0
    %1294 = vdwg.mxu0
    %1295 = vmatpush.bf16.msra.mxu0 %v407
    %1296 = vmatpush.bf16.msra.mxu0 %v403
    %1297 = vmatpush.bf16.msra.mxu0 %v399
    %1298 = vmatpush.bf16.msra.mxu0 %v395
    %1299 = vmatpush.bf16.msra.mxu0 %v391
    %1300 = vmatpush.bf16.msra.mxu0 %v387
    %1301 = vmatpush.bf16.msra.mxu0 %v383
    %1302 = vmatpush.bf16.msra.mxu0 %v379
    %1303 = vmatmul.bf16.gmra.mxu0 %v1281
    %v1304 = vpop.f32.mrf.mxu0
    %v1305 = vadd.f32 0.0, %v1304
    %v1306 = vpop.f32.mrf.mxu0
    %1307 = vdwg.mxu0
    %1308 = vmatpush.bf16.msra.mxu0 %v408
    %1309 = vmatpush.bf16.msra.mxu0 %v404
    %1310 = vmatpush.bf16.msra.mxu0 %v400
    %1311 = vmatpush.bf16.msra.mxu0 %v396
    %1312 = vmatpush.bf16.msra.mxu0 %v392
    %1313 = vmatpush.bf16.msra.mxu0 %v388
    %1314 = vmatpush.bf16.msra.mxu0 %v384
    %1315 = vmatpush.bf16.msra.mxu0 %v380
    %1316 = vmatmul.bf16.gmra.mxu0 %v1281
    %v1317 = vpop.f32.mrf.mxu0
    %v1318 = vadd.f32 0.0, %v1317
    %v1319 = vpop.f32.mrf.mxu0
    %1320 = vdwg.mxu0
    %1321 = vmatpush.bf16.msra.mxu0 %v409
    %1322 = vmatpush.bf16.msra.mxu0 %v405
    %1323 = vmatpush.bf16.msra.mxu0 %v401
    %1324 = vmatpush.bf16.msra.mxu0 %v397
    %1325 = vmatpush.bf16.msra.mxu0 %v393
    %1326 = vmatpush.bf16.msra.mxu0 %v389
    %1327 = vmatpush.bf16.msra.mxu0 %v385
    %1328 = vmatpush.bf16.msra.mxu0 %v381
    %1329 = vmatmul.bf16.gmra.mxu0 %v1281
    %v1330 = vpop.f32.mrf.mxu0
    %v1331 = vadd.f32 0.0, %v1330
    %v1332 = vpop.f32.mrf.mxu0
    %1333 = vdwg.mxu0
    %v1334 = vadd.f32 %v191, %v1292
    %v1335 = vadd.f32 %v220, %v1305
    %v1336 = vadd.f32 %v249, %v1318
    %v1337 = vadd.f32 %v278, %v1331
    %v1338 = vxor.u32 %v1334, 2147483648
    %v1339 = vxor.u32 %v1335, 2147483648
    %v1340 = vxor.u32 %v1336, 2147483648
    %v1341 = vxor.u32 %v1337, 2147483648
    %v1342 = vmul.f32 %v1338, 1.442695
    %v1343 = vpow.pop %v1342
    %v1344 = vmul.f32 %v1339, 1.442695
    %v1345 = vpow.pop %v1344
    %v1346 = vmul.f32 %v1340, 1.442695
    %v1347 = vpow.pop %v1346
    %v1348 = vmul.f32 %v1341, 1.442695
    %v1349 = vpow.pop %v1348
    %v1350 = vadd.f32 %v1343, 1.0
    %v1351 = vadd.f32 %v1345, 1.0
    %v1352 = vadd.f32 %v1347, 1.0
    %v1353 = vadd.f32 %v1349, 1.0
    %v1354 = vrcp.pop %v1350
    %v1355 = vmul.f32 %v1350, %v1354
    %v1356 = vsub.f32 1.0, %v1355
    %v1357 = vmul.f32 %v1354, %v1356
    %v1358 = vadd.f32 %v1354, %v1357
    %vm1359 = vweird.f32 %v1350
    %vm1360 = vweird.f32 %v1354
    %vm1361 = vmor %vm1359, %vm1360
    %v1362 = vsel %vm1361, %v1354, %v1358
    %v1363 = vand.u32 2147483647, %v1350
    %vm1364 = vcmp.eq.f32.partialorder %v1363, 8.507059e+37
    %v1365 = vand.u32 %v1350, 2147483648
    %v1366 = vor.u32 1.1754944e-38, %v1365
    %v1367 = vsel %vm1364, %v1366, %v1362
    %v1368 = vmul.f32 1.0, %v1367
    %v1369 = vrcp.pop %v1351
    %v1370 = vmul.f32 %v1351, %v1369
    %v1371 = vsub.f32 1.0, %v1370
    %v1372 = vmul.f32 %v1369, %v1371
    %v1373 = vadd.f32 %v1369, %v1372
    %vm1374 = vweird.f32 %v1351
    %vm1375 = vweird.f32 %v1369
    %vm1376 = vmor %vm1374, %vm1375
    %v1377 = vsel %vm1376, %v1369, %v1373
    %v1378 = vand.u32 2147483647, %v1351
    %vm1379 = vcmp.eq.f32.partialorder %v1378, 8.507059e+37
    %v1380 = vand.u32 %v1351, 2147483648
    %v1381 = vor.u32 1.1754944e-38, %v1380
    %v1382 = vsel %vm1379, %v1381, %v1377
    %v1383 = vmul.f32 1.0, %v1382
    %v1384 = vrcp.pop %v1352
    %v1385 = vmul.f32 %v1352, %v1384
    %v1386 = vsub.f32 1.0, %v1385
    %v1387 = vmul.f32 %v1384, %v1386
    %v1388 = vadd.f32 %v1384, %v1387
    %vm1389 = vweird.f32 %v1352
    %vm1390 = vweird.f32 %v1384
    %vm1391 = vmor %vm1389, %vm1390
    %v1392 = vsel %vm1391, %v1384, %v1388
    %v1393 = vand.u32 2147483647, %v1352
    %vm1394 = vcmp.eq.f32.partialorder %v1393, 8.507059e+37
    %v1395 = vand.u32 %v1352, 2147483648
    %v1396 = vor.u32 1.1754944e-38, %v1395
    %v1397 = vsel %vm1394, %v1396, %v1392
    %v1398 = vmul.f32 1.0, %v1397
    %v1399 = vrcp.pop %v1353
    %v1400 = vmul.f32 %v1353, %v1399
    %v1401 = vsub.f32 1.0, %v1400
    %v1402 = vmul.f32 %v1399, %v1401
    %v1403 = vadd.f32 %v1399, %v1402
    %vm1404 = vweird.f32 %v1353
    %vm1405 = vweird.f32 %v1399
    %vm1406 = vmor %vm1404, %vm1405
    %v1407 = vsel %vm1406, %v1399, %v1403
    %v1408 = vand.u32 2147483647, %v1353
    %vm1409 = vcmp.eq.f32.partialorder %v1408, 8.507059e+37
    %v1410 = vand.u32 %v1353, 2147483648
    %v1411 = vor.u32 1.1754944e-38, %v1410
    %v1412 = vsel %vm1409, %v1411, %v1407
    %v1413 = vmul.f32 1.0, %v1412
    %v1414 = vmul.f32 %v1398, 2.0
    %v1415 = vsub.f32 %v1414, 1.0
    %v1416 = vmul.f32 %v1383, %v1278
    %v1417 = vmul.f32 %v1368, %v1415
    %v1418 = vadd.f32 %v1416, %v1417
    %v1419 = vtanh.pop %v1418
    %v1420 = vmul.f32 %v1413, %v1419
    %v1421 = vpack.c.bf16 %v1420, %v1420
    %1422 = vmatpush.bf16.msra.mxu0 %v406
    %1423 = vmatpush.bf16.msra.mxu0 %v402
    %1424 = vmatpush.bf16.msra.mxu0 %v398
    %1425 = vmatpush.bf16.msra.mxu0 %v394
    %1426 = vmatpush.bf16.msra.mxu0 %v390
    %1427 = vmatpush.bf16.msra.mxu0 %v386
    %1428 = vmatpush.bf16.msra.mxu0 %v382
    %1429 = vmatpush.bf16.msra.mxu0 %v378
    %1430 = vmatmul.bf16.gmra.mxu0 %v1421
    %v1431 = vpop.f32.mrf.mxu0
    %v1432 = vadd.f32 0.0, %v1431
    %v1433 = vpop.f32.mrf.mxu0
    %1434 = vdwg.mxu0
    %1435 = vmatpush.bf16.msra.mxu0 %v407
    %1436 = vmatpush.bf16.msra.mxu0 %v403
    %1437 = vmatpush.bf16.msra.mxu0 %v399
    %1438 = vmatpush.bf16.msra.mxu0 %v395
    %1439 = vmatpush.bf16.msra.mxu0 %v391
    %1440 = vmatpush.bf16.msra.mxu0 %v387
    %1441 = vmatpush.bf16.msra.mxu0 %v383
    %1442 = vmatpush.bf16.msra.mxu0 %v379
    %1443 = vmatmul.bf16.gmra.mxu0 %v1421
    %v1444 = vpop.f32.mrf.mxu0
    %v1445 = vadd.f32 0.0, %v1444
    %v1446 = vpop.f32.mrf.mxu0
    %1447 = vdwg.mxu0
    %1448 = vmatpush.bf16.msra.mxu0 %v408
    %1449 = vmatpush.bf16.msra.mxu0 %v404
    %1450 = vmatpush.bf16.msra.mxu0 %v400
    %1451 = vmatpush.bf16.msra.mxu0 %v396
    %1452 = vmatpush.bf16.msra.mxu0 %v392
    %1453 = vmatpush.bf16.msra.mxu0 %v388
    %1454 = vmatpush.bf16.msra.mxu0 %v384
    %1455 = vmatpush.bf16.msra.mxu0 %v380
    %1456 = vmatmul.bf16.gmra.mxu0 %v1421
    %v1457 = vpop.f32.mrf.mxu0
    %v1458 = vadd.f32 0.0, %v1457
    %v1459 = vpop.f32.mrf.mxu0
    %1460 = vdwg.mxu0
    %1461 = vmatpush.bf16.msra.mxu0 %v409
    %1462 = vmatpush.bf16.msra.mxu0 %v405
    %1463 = vmatpush.bf16.msra.mxu0 %v401
    %1464 = vmatpush.bf16.msra.mxu0 %v397
    %1465 = vmatpush.bf16.msra.mxu0 %v393
    %1466 = vmatpush.bf16.msra.mxu0 %v389
    %1467 = vmatpush.bf16.msra.mxu0 %v385
    %1468 = vmatpush.bf16.msra.mxu0 %v381
    %1469 = vmatmul.bf16.gmra.mxu0 %v1421
    %v1470 = vpop.f32.mrf.mxu0
    %v1471 = vadd.f32 0.0, %v1470
    %v1472 = vpop.f32.mrf.mxu0
    %1473 = vdwg.mxu0
    %v1474 = vadd.f32 %v193, %v1432
    %v1475 = vadd.f32 %v222, %v1445
    %v1476 = vadd.f32 %v251, %v1458
    %v1477 = vadd.f32 %v280, %v1471
    %v1478 = vxor.u32 %v1474, 2147483648
    %v1479 = vxor.u32 %v1475, 2147483648
    %v1480 = vxor.u32 %v1476, 2147483648
    %v1481 = vxor.u32 %v1477, 2147483648
    %v1482 = vmul.f32 %v1478, 1.442695
    %v1483 = vpow.pop %v1482
    %v1484 = vmul.f32 %v1479, 1.442695
    %v1485 = vpow.pop %v1484
    %v1486 = vmul.f32 %v1480, 1.442695
    %v1487 = vpow.pop %v1486
    %v1488 = vmul.f32 %v1481, 1.442695
    %v1489 = vpow.pop %v1488
    %v1490 = vadd.f32 %v1483, 1.0
    %v1491 = vadd.f32 %v1485, 1.0
    %v1492 = vadd.f32 %v1487, 1.0
    %v1493 = vadd.f32 %v1489, 1.0
    %v1494 = vrcp.pop %v1490
    %v1495 = vmul.f32 %v1490, %v1494
    %v1496 = vsub.f32 1.0, %v1495
    %v1497 = vmul.f32 %v1494, %v1496
    %v1498 = vadd.f32 %v1494, %v1497
    %vm1499 = vweird.f32 %v1490
    %vm1500 = vweird.f32 %v1494
    %vm1501 = vmor %vm1499, %vm1500
    %v1502 = vsel %vm1501, %v1494, %v1498
    %v1503 = vand.u32 2147483647, %v1490
    %vm1504 = vcmp.eq.f32.partialorder %v1503, 8.507059e+37
    %v1505 = vand.u32 %v1490, 2147483648
    %v1506 = vor.u32 1.1754944e-38, %v1505
    %v1507 = vsel %vm1504, %v1506, %v1502
    %v1508 = vmul.f32 1.0, %v1507
    %v1509 = vrcp.pop %v1491
    %v1510 = vmul.f32 %v1491, %v1509
    %v1511 = vsub.f32 1.0, %v1510
    %v1512 = vmul.f32 %v1509, %v1511
    %v1513 = vadd.f32 %v1509, %v1512
    %vm1514 = vweird.f32 %v1491
    %vm1515 = vweird.f32 %v1509
    %vm1516 = vmor %vm1514, %vm1515
    %v1517 = vsel %vm1516, %v1509, %v1513
    %v1518 = vand.u32 2147483647, %v1491
    %vm1519 = vcmp.eq.f32.partialorder %v1518, 8.507059e+37
    %v1520 = vand.u32 %v1491, 2147483648
    %v1521 = vor.u32 1.1754944e-38, %v1520
    %v1522 = vsel %vm1519, %v1521, %v1517
    %v1523 = vmul.f32 1.0, %v1522
    %v1524 = vrcp.pop %v1492
    %v1525 = vmul.f32 %v1492, %v1524
    %v1526 = vsub.f32 1.0, %v1525
    %v1527 = vmul.f32 %v1524, %v1526
    %v1528 = vadd.f32 %v1524, %v1527
    %vm1529 = vweird.f32 %v1492
    %vm1530 = vweird.f32 %v1524
    %vm1531 = vmor %vm1529, %vm1530
    %v1532 = vsel %vm1531, %v1524, %v1528
    %v1533 = vand.u32 2147483647, %v1492
    %vm1534 = vcmp.eq.f32.partialorder %v1533, 8.507059e+37
    %v1535 = vand.u32 %v1492, 2147483648
    %v1536 = vor.u32 1.1754944e-38, %v1535
    %v1537 = vsel %vm1534, %v1536, %v1532
    %v1538 = vmul.f32 1.0, %v1537
    %v1539 = vrcp.pop %v1493
    %v1540 = vmul.f32 %v1493, %v1539
    %v1541 = vsub.f32 1.0, %v1540
    %v1542 = vmul.f32 %v1539, %v1541
    %v1543 = vadd.f32 %v1539, %v1542
    %vm1544 = vweird.f32 %v1493
    %vm1545 = vweird.f32 %v1539
    %vm1546 = vmor %vm1544, %vm1545
    %v1547 = vsel %vm1546, %v1539, %v1543
    %v1548 = vand.u32 2147483647, %v1493
    %vm1549 = vcmp.eq.f32.partialorder %v1548, 8.507059e+37
    %v1550 = vand.u32 %v1493, 2147483648
    %v1551 = vor.u32 1.1754944e-38, %v1550
    %v1552 = vsel %vm1549, %v1551, %v1547
    %v1553 = vmul.f32 1.0, %v1552
    %v1554 = vmul.f32 %v1538, 2.0
    %v1555 = vsub.f32 %v1554, 1.0
    %v1556 = vmul.f32 %v1523, %v1418
    %v1557 = vmul.f32 %v1508, %v1555
    %v1558 = vadd.f32 %v1556, %v1557
    %v1559 = vtanh.pop %v1558
    %v1560 = vmul.f32 %v1553, %v1559
    %v1561 = vpack.c.bf16 %v1560, %v1560
    %v1562 = vld [vmem:[%s4] sm:$0xf]
    %v1563 = vld [vmem:[%s4 + $0x4] sm:$0xf]
    %v1564 = vld [vmem:[%s4 + $0x8] sm:$0xf]
    %v1565 = vld [vmem:[%s4 + $0xc] sm:$0xf]
    %v1566 = vld [vmem:[%s4 + $0x10] sm:$0xf]
    %v1567 = vld [vmem:[%s4 + $0x14] sm:$0xf]
    %v1568 = vld [vmem:[%s4 + $0x18] sm:$0xf]
    %v1569 = vld [vmem:[%s4 + $0x1c] sm:$0xf]
    %v1570 = vld [vmem:[%s4 + $0x20] sm:$0xf]
    %v1571 = vld [vmem:[%s4 + $0x24] sm:$0xf]
    %v1572 = vld [vmem:[%s4 + $0x28] sm:$0xf]
    %v1573 = vld [vmem:[%s4 + $0x2c] sm:$0xf]
    %v1574 = vld [vmem:[%s4 + $0x30] sm:$0xf]
    %v1575 = vld [vmem:[%s4 + $0x34] sm:$0xf]
    %v1576 = vld [vmem:[%s4 + $0x38] sm:$0xf]
    %v1577 = vld [vmem:[%s4 + $0x3c] sm:$0xf]
    %v1578 = vld [vmem:[%s5] sm:$0x1]
    %v1580 = vperm.slane %v1578, 0
    %v1598 = vunpack.c.l.b16 %v1562
    %v1599 = vunpack.c.l.b16 %v1563
    %v1600 = vunpack.c.l.b16 %v1564
    %v1601 = vunpack.c.l.b16 %v1565
    %v1602 = vunpack.c.l.b16 %v1566
    %v1603 = vunpack.c.l.b16 %v1567
    %v1604 = vunpack.c.l.b16 %v1568
    %v1605 = vunpack.c.l.b16 %v1569
    %v1606 = vunpack.c.l.b16 %v1570
    %v1607 = vunpack.c.l.b16 %v1571
    %v1608 = vunpack.c.l.b16 %v1572
    %v1609 = vunpack.c.l.b16 %v1573
    %v1610 = vunpack.c.l.b16 %v1574
    %v1611 = vunpack.c.l.b16 %v1575
    %v1612 = vunpack.c.l.b16 %v1576
    %v1613 = vunpack.c.l.b16 %v1577
    %v1614 = vpack.c.b16 %v1599, %v1598
    %v1615 = vpack.c.b16 %v1601, %v1600
    %v1616 = vpack.c.b16 %v1603, %v1602
    %v1617 = vpack.c.b16 %v1605, %v1604
    %v1618 = vpack.c.b16 %v1607, %v1606
    %v1619 = vpack.c.b16 %v1609, %v1608
    %v1620 = vpack.c.b16 %v1611, %v1610
    %v1621 = vpack.c.b16 %v1613, %v1612
    %1630 = vmatpush.bf16.msra.mxu0 %v1621
    %1631 = vmatpush.bf16.msra.mxu0 %v1620
    %1632 = vmatpush.bf16.msra.mxu0 %v1619
    %1633 = vmatpush.bf16.msra.mxu0 %v1618
    %1634 = vmatpush.bf16.msra.mxu0 %v1617
    %1635 = vmatpush.bf16.msra.mxu0 %v1616
    %1636 = vmatpush.bf16.msra.mxu0 %v1615
    %1637 = vmatpush.bf16.msra.mxu0 %v1614
    %1638 = vmatmul.bf16.gmra.mxu0 %v1561
    %v1639 = vpop.f32.mrf.mxu0
    %v1640 = vadd.f32 %v1580, %v1639
    %v1641 = vpop.f32.mrf.mxu0
    %1642 = vdwg.mxu0
    %1643 = vst [vmem:[%s6] sm:$0xff] %v1640
    // Predicated region
    $region38: #{drone_movement_forward.1} parent=1 // pred_check
      _
    $region39: #{drone_movement_forward.1} parent=1 // pred_check_branch
      %1645 = sbr.rel (0) target = $region41
    $region40: #{drone_movement_forward.1} parent=1 // pred_region
      _
    $region41: #{drone_movement_forward.1} parent=1 // pred_fallthru
      _
    // Predicated region
    $region42: #{drone_movement_forward.1} parent=1 // pred_check
      _
    $region43: #{drone_movement_forward.1} parent=1 // pred_check_branch
      %1647 = sbr.rel (0) target = $region45
    $region44: #{drone_movement_forward.1} parent=1 // pred_region
      _
    $region45: #{drone_movement_forward.1} parent=1 // pred_fallthru
      _
    %1648 = vsyncpa [#allocation3], 1
    %1649 = vsyncpa [#allocation5], 1

</llo_original>
